<compile_context>
chip_gen: v7x
topology: tpu7x:2x2x1
jax: 0.10.0
libtpu: 0.0.40
codegen_flags: <defaults>
</compile_context>

<pallas_src>
import jax
import jax.numpy as jnp
from jax.experimental import pallas as pl
from jax.experimental.pallas import tpu as pltpu


# ----------------------------------------------------------------------------
# helpers
# ----------------------------------------------------------------------------
def _layer_takes_skip(i, skips):
    # pts_linears[i] (i >= 1) consumes cat([input_pts, h]) iff (i - 1) in skips
    return i >= 1 and (i - 1) in skips


def _rup8(n):
    return ((n + 7) // 8) * 8


def _pad_rows(w, to_rows):
    pad = to_rows - w.shape[0]
    if pad == 0:
        return w
    return jnp.concatenate([w, jnp.zeros((pad, w.shape[1]), w.dtype)], axis=0)


def _pad_cols(w, to_cols):
    pad = to_cols - w.shape[1]
    if pad == 0:
        return w
    return jnp.concatenate([w, jnp.zeros((w.shape[0], pad), w.dtype)], axis=1)


# ----------------------------------------------------------------------------
# deterministic parameter init (torch.nn.Linear style, weights stored (in,out))
# ----------------------------------------------------------------------------
def init_nerf_params(key, *, D, W, input_ch, input_ch_views, output_ch,
                     skips, use_viewdirs, dtype=jnp.float32):
    def linear(k, fan_in, fan_out):
        kw, kb = jax.random.split(k)
        bound = float(fan_in) ** -0.5
        w = jax.random.uniform(kw, (fan_in, fan_out), dtype, -bound, bound)
        b = jax.random.uniform(kb, (1, fan_out), dtype, -bound, bound)
        return w, b

    keys = list(jax.random.split(key, D + 5))
    ki = 0
    params = {"pts": []}
    for i in range(D):
        if i == 0:
            in_dim = input_ch
        elif _layer_takes_skip(i, skips):
            in_dim = W + input_ch
        else:
            in_dim = W
        params["pts"].append(linear(keys[ki], in_dim, W)); ki += 1

    head_in = W + (input_ch if (D - 1) in skips else 0)
    if use_viewdirs:
        params["feature"] = linear(keys[ki], head_in, W); ki += 1
        params["alpha"] = linear(keys[ki], head_in, 1); ki += 1
        params["views"] = linear(keys[ki], input_ch_views + W, W // 2); ki += 1
        params["rgb"] = linear(keys[ki], W // 2, 3); ki += 1
    else:
        params["output"] = linear(keys[ki], head_in, output_ch); ki += 1
    return params


# ----------------------------------------------------------------------------
# flatten (pre-split / pad / fuse / cast) the params in kernel read order
# ----------------------------------------------------------------------------
def flatten_params_for_kernel(params, *, D, W, input_ch, input_ch_views,
                              output_ch, skips, use_viewdirs,
                              compute_dtype=jnp.bfloat16):
    pic = _rup8(input_ch)
    picv = _rup8(input_ch_views)
    head_skip = (D - 1) in skips
    out_pad = _rup8(4 if use_viewdirs else output_ch)
    flat = []

    def emit_w(w):
        flat.append(w.astype(compute_dtype))       # MXU operands in bf16

    def emit_b(b):
        flat.append(b.astype(jnp.float32))         # bias add stays f32

    def emit(w, b, takes_skip):
        if takes_skip:
            emit_w(_pad_rows(w[:input_ch], pic))   # multiplies input_pts
            emit_w(w[input_ch:])                   # multiplies running h
        else:
            emit_w(w)
        emit_b(b)

    for i in range(D):
        w, b = params["pts"][i]
        if i == 0:
            emit_w(_pad_rows(w, pic))
            emit_b(b)
        else:
            emit(w, b, _layer_takes_skip(i, skips))

    if use_viewdirs:
        wf, bf = params["feature"]
        wa, ba = params["alpha"]
        wp = _rup8(W + 1)
        # fused head: columns = [feature (W) | alpha (1) | zero-pad]
        wfa = _pad_cols(jnp.concatenate([wf, wa], axis=1), wp)
        bfa = _pad_cols(jnp.concatenate([bf, ba], axis=1), wp)
        emit(wfa, bfa, head_skip)

        wv, bv = params["views"]
        # views_linears weight, rows re-indexed by the fused-head columns:
        # feature rows first, then zero rows under the alpha/pad columns.
        emit_w(_pad_rows(wv[:W], wp))              # multiplies fa
        emit_w(_pad_rows(wv[W:], picv))            # multiplies input_views
        emit_b(bv)

        wr, br = params["rgb"]
        emit_w(_pad_cols(wr, out_pad))             # rgb -> output cols 0..2
        # selector routes the (already biased) alpha column of fa to col 3
        sel = jnp.zeros((wp, out_pad), jnp.float32).at[W, 3].set(1.0)
        emit_w(sel)
        emit_b(_pad_cols(br, out_pad))
    else:
        wo, bo = params["output"]
        emit(_pad_cols(wo, out_pad), _pad_cols(bo, out_pad), head_skip)
    return flat


# ----------------------------------------------------------------------------
# Pallas kernel
# ----------------------------------------------------------------------------
def _make_kernel(D, skips, use_viewdirs):
    head_skip = (D - 1) in skips

    def kernel(pts_ref, views_ref, *refs):
        out_ref = refs[-1]
        it = iter(refs[:-1])

        def nxt():
            return next(it)[...]

        def mm(a, w):
            # MXU: bf16 x bf16 -> f32 accumulation.
            return jnp.dot(a.astype(jnp.bfloat16), w,
                           preferred_element_type=jnp.float32)

        pts = pts_ref[...]          # already bf16 (cast in the wrapper)

        def apply_layer(h, takes_skip):
            if takes_skip:
                w_p = nxt(); w_h = nxt(); b = nxt()
                return mm(pts, w_p) + mm(h, w_h) + b
            w = nxt(); b = nxt()
            return mm(h, w) + b

        # pts_linears[0]
        w0 = nxt(); b0 = nxt()
        h = jnp.maximum(mm(pts, w0) + b0, 0.0)
        # pts_linears[1:D]
        for i in range(1, D):
            h = jnp.maximum(apply_layer(h, _layer_takes_skip(i, skips)), 0.0)

        if use_viewdirs:
            # fused feature/alpha head: fa = [feature | alpha | 0-pad]
            fa = apply_layer(h, head_skip).astype(jnp.bfloat16)
            views = views_ref[...]                  # already bf16
            wv_f = nxt(); wv_v = nxt(); bv = nxt()
            h2 = jnp.maximum(mm(fa, wv_f) + mm(views, wv_v) + bv, 0.0)
            wr = nxt(); sel = nxt(); br = nxt()
            # out = [rgb | alpha | 0-pad]; sel routes fa's alpha column to col 3
            out = mm(h2, wr) + mm(fa, sel) + br
        else:
            out = apply_layer(h, head_skip)         # output_linear, no ReLU

        out_ref[...] = out.astype(out_ref.dtype)    # single lane-dense store

    return kernel


# ----------------------------------------------------------------------------
# wrapper
# ----------------------------------------------------------------------------
def nerf_forward_pallas(x, params, *, D, W, input_ch, input_ch_views,
                        output_ch, skips, use_viewdirs, block_rows=512):
    N, C = x.shape
    assert C == input_ch + input_ch_views
    assert W % 8 == 0

    pic = _rup8(input_ch)
    picv = _rup8(input_ch_views)
    out_dim = 4 if use_viewdirs else output_ch
    out_pad = _rup8(out_dim)

    # Tile choice: large tiles amortize the ~0.35us/step overhead, but keep at
    # least 2 grid steps whenever possible so both v7x TensorCores get work.
    bm = max(8, min(block_rows, _rup8(pl.cdiv(N, 2))))
    n_pad = pl.cdiv(N, bm) * bm

    pts = jnp.pad(x[:, :input_ch],
                  ((0, n_pad - N), (0, pic - input_ch))).astype(jnp.bfloat16)
    views = jnp.pad(x[:, input_ch:input_ch + input_ch_views],
                    ((0, n_pad - N), (0, picv - input_ch_views))
                    ).astype(jnp.bfloat16)

    flat = flatten_params_for_kernel(
        params, D=D, W=W, input_ch=input_ch, input_ch_views=input_ch_views,
        output_ch=output_ch, skips=skips, use_viewdirs=use_viewdirs)

    grid = (n_pad // bm,)
    in_specs = [
        pl.BlockSpec((bm, pic), lambda i: (i, 0)),
        pl.BlockSpec((bm, picv), lambda i: (i, 0)),
    ]
    for p in flat:
        in_specs.append(pl.BlockSpec(p.shape, lambda i: (0, 0)))
    out_specs = pl.BlockSpec((bm, out_pad), lambda i: (i, 0))

    kernel = _make_kernel(D, skips, use_viewdirs)
    out = pl.pallas_call(
        kernel,
        out_shape=jax.ShapeDtypeStruct((n_pad, out_pad), x.dtype),
        grid_spec=pltpu.PrefetchScalarGridSpec(
            num_scalar_prefetch=0,
            grid=grid,
            in_specs=in_specs,
            out_specs=out_specs,
        ),
        compiler_params=pltpu.CompilerParams(
            dimension_semantics=("parallel",),
            vmem_limit_bytes=48 * 1024 * 1024,   # fits v7x 64 MiB/TC budget
        ),
    )(pts, views, *flat)
    return out[:N, :out_dim]


# ----------------------------------------------------------------------------
# pure-JAX reference (mirrors the PyTorch forward exactly, with concatenation)
# ----------------------------------------------------------------------------
def nerf_reference(x, params, *, D, input_ch, input_ch_views, skips,
                   use_viewdirs):
    hi = jax.lax.Precision.HIGHEST
    pts = x[:, :input_ch]
    views = x[:, input_ch:input_ch + input_ch_views]
    h = pts
    for i in range(D):
        w, b = params["pts"][i]
        h = jnp.maximum(jnp.dot(h, w, precision=hi) + b, 0.0)
        if i in skips:
            h = jnp.concatenate([pts, h], axis=-1)
    if use_viewdirs:
        wa, ba = params["alpha"]
        alpha = jnp.dot(h, wa, precision=hi) + ba
        wf, bf = params["feature"]
        feature = jnp.dot(h, wf, precision=hi) + bf
        h2 = jnp.concatenate([feature, views], axis=-1)
        wv, bv = params["views"]
        h2 = jnp.maximum(jnp.dot(h2, wv, precision=hi) + bv, 0.0)
        wr, br = params["rgb"]
        rgb = jnp.dot(h2, wr, precision=hi) + br
        return jnp.concatenate([rgb, alpha], axis=-1)
    wo, bo = params["output"]
    return jnp.dot(h, wo, precision=hi) + bo


# ----------------------------------------------------------------------------
if __name__ == "__main__":
    # Small config consistent with the module (D layers of width W, skip at 4).
    D = 8
    W = 64
    input_ch = 3
    input_ch_views = 3
    output_ch = 4
    skips = (4,)
    N = 256

    key = jax.random.PRNGKey(0)
    kx, kp0, kp1 = jax.random.split(key, 3)
    x = jax.random.uniform(kx, (N, input_ch + input_ch_views),
                           jnp.float32, -1.0, 1.0)

    for use_viewdirs, kp in ((False, kp0), (True, kp1)):
        params = init_nerf_params(
            kp, D=D, W=W, input_ch=input_ch, input_ch_views=input_ch_views,
            output_ch=output_ch, skips=skips, use_viewdirs=use_viewdirs)

        out = nerf_forward_pallas(
            x, params, D=D, W=W, input_ch=input_ch,
            input_ch_views=input_ch_views, output_ch=output_ch, skips=skips,
            use_viewdirs=use_viewdirs)
        out = jax.block_until_ready(out)

        ref = nerf_reference(
            x, params, D=D, input_ch=input_ch, input_ch_views=input_ch_views,
            skips=skips, use_viewdirs=use_viewdirs)

        assert out.shape == ref.shape, (out.shape, ref.shape)
        # bf16 matmul operands vs. a HIGHEST-precision f32 reference -> loose
        # tolerance (structural bugs would produce errors orders larger).
        if not bool(jnp.allclose(out, ref, atol=5e-2, rtol=5e-2)):
            max_err = float(jnp.max(jnp.abs(out - ref)))
            raise AssertionError(
                f"mismatch (use_viewdirs={use_viewdirs}) max_abs_err={max_err}")

    print("KERNEL_OK")
</pallas_src>

<mosaic_0001>
module attributes {stable_mosaic.version = 11 : i64} {
  func.func @kernel(%arg0: i32, %arg1: memref<128x8xbf16, #tpu.memory_space<vmem>>, %arg2: memref<128x8xbf16, #tpu.memory_space<vmem>>, %arg3: memref<8x64xbf16, #tpu.memory_space<vmem>>, %arg4: memref<1x64xf32, #tpu.memory_space<vmem>>, %arg5: memref<64x64xbf16, #tpu.memory_space<vmem>>, %arg6: memref<1x64xf32, #tpu.memory_space<vmem>>, %arg7: memref<64x64xbf16, #tpu.memory_space<vmem>>, %arg8: memref<1x64xf32, #tpu.memory_space<vmem>>, %arg9: memref<64x64xbf16, #tpu.memory_space<vmem>>, %arg10: memref<1x64xf32, #tpu.memory_space<vmem>>, %arg11: memref<64x64xbf16, #tpu.memory_space<vmem>>, %arg12: memref<1x64xf32, #tpu.memory_space<vmem>>, %arg13: memref<8x64xbf16, #tpu.memory_space<vmem>>, %arg14: memref<64x64xbf16, #tpu.memory_space<vmem>>, %arg15: memref<1x64xf32, #tpu.memory_space<vmem>>, %arg16: memref<64x64xbf16, #tpu.memory_space<vmem>>, %arg17: memref<1x64xf32, #tpu.memory_space<vmem>>, %arg18: memref<64x64xbf16, #tpu.memory_space<vmem>>, %arg19: memref<1x64xf32, #tpu.memory_space<vmem>>, %arg20: memref<64x8xbf16, #tpu.memory_space<vmem>>, %arg21: memref<1x8xf32, #tpu.memory_space<vmem>>, %arg22: memref<128x8xf32, #tpu.memory_space<vmem>>) attributes {dimension_semantics = [#tpu.dimension_semantics<parallel>], iteration_bounds = array<i64: 2>, scalar_prefetch = 0 : i64, scratch_operands = 0 : i64, tpu.core_type = #tpu.core_type<tc>, window_params = [{transform_indices = @transform_0, window_bounds = array<i64: 128, 8>}, {transform_indices = @transform_1, window_bounds = array<i64: 128, 8>}, {pipeline_mode = #tpu.pipeline_mode<synchronous>, transform_indices = @transform_2, window_bounds = array<i64: 8, 64>}, {pipeline_mode = #tpu.pipeline_mode<synchronous>, transform_indices = @transform_3, window_bounds = array<i64: 1, 64>}, {pipeline_mode = #tpu.pipeline_mode<synchronous>, transform_indices = @transform_4, window_bounds = array<i64: 64, 64>}, {pipeline_mode = #tpu.pipeline_mode<synchronous>, transform_indices = @transform_5, window_bounds = array<i64: 1, 64>}, {pipeline_mode = #tpu.pipeline_mode<synchronous>, transform_indices = @transform_6, window_bounds = array<i64: 64, 64>}, {pipeline_mode = #tpu.pipeline_mode<synchronous>, transform_indices = @transform_7, window_bounds = array<i64: 1, 64>}, {pipeline_mode = #tpu.pipeline_mode<synchronous>, transform_indices = @transform_8, window_bounds = array<i64: 64, 64>}, {pipeline_mode = #tpu.pipeline_mode<synchronous>, transform_indices = @transform_9, window_bounds = array<i64: 1, 64>}, {pipeline_mode = #tpu.pipeline_mode<synchronous>, transform_indices = @transform_10, window_bounds = array<i64: 64, 64>}, {pipeline_mode = #tpu.pipeline_mode<synchronous>, transform_indices = @transform_11, window_bounds = array<i64: 1, 64>}, {pipeline_mode = #tpu.pipeline_mode<synchronous>, transform_indices = @transform_12, window_bounds = array<i64: 8, 64>}, {pipeline_mode = #tpu.pipeline_mode<synchronous>, transform_indices = @transform_13, window_bounds = array<i64: 64, 64>}, {pipeline_mode = #tpu.pipeline_mode<synchronous>, transform_indices = @transform_14, window_bounds = array<i64: 1, 64>}, {pipeline_mode = #tpu.pipeline_mode<synchronous>, transform_indices = @transform_15, window_bounds = array<i64: 64, 64>}, {pipeline_mode = #tpu.pipeline_mode<synchronous>, transform_indices = @transform_16, window_bounds = array<i64: 1, 64>}, {pipeline_mode = #tpu.pipeline_mode<synchronous>, transform_indices = @transform_17, window_bounds = array<i64: 64, 64>}, {pipeline_mode = #tpu.pipeline_mode<synchronous>, transform_indices = @transform_18, window_bounds = array<i64: 1, 64>}, {pipeline_mode = #tpu.pipeline_mode<synchronous>, transform_indices = @transform_19, window_bounds = array<i64: 64, 8>}, {pipeline_mode = #tpu.pipeline_mode<synchronous>, transform_indices = @transform_20, window_bounds = array<i64: 1, 8>}, {transform_indices = @transform_21, window_bounds = array<i64: 128, 8>}]} {
    %c0 = arith.constant 0 : index
    %c0_0 = arith.constant 0 : index
    %0 = vector.load %arg1[%c0, %c0_0] : memref<128x8xbf16, #tpu.memory_space<vmem>>, vector<128x8xbf16>
    %c0_1 = arith.constant 0 : index
    %c0_2 = arith.constant 0 : index
    %1 = vector.load %arg3[%c0_1, %c0_2] : memref<8x64xbf16, #tpu.memory_space<vmem>>, vector<8x64xbf16>
    %c0_3 = arith.constant 0 : index
    %c0_4 = arith.constant 0 : index
    %2 = vector.load %arg4[%c0_3, %c0_4] : memref<1x64xf32, #tpu.memory_space<vmem>>, vector<1x64xf32>
    %cst = arith.constant dense<0.000000e+00> : vector<128x64xf32>
    %3 = tpu.matmul %0, %1, %cst {dimension_numbers = #tpu.dot_dimension_numbers<[1], [0], [0], [1], [0, 0, 1, 1], [], []>} : vector<128x8xbf16>, vector<8x64xbf16>, vector<128x64xf32> -> vector<128x64xf32>
    %4 = vector.broadcast %2 : vector<1x64xf32> to vector<128x64xf32>
    %5 = arith.addf %3, %4 : vector<128x64xf32>
    %cst_5 = arith.constant 0.000000e+00 : f32
    %6 = vector.broadcast %cst_5 : f32 to vector<128x64xf32>
    %7 = arith.maximumf %5, %6 : vector<128x64xf32>
    %c0_6 = arith.constant 0 : index
    %c0_7 = arith.constant 0 : index
    %8 = vector.load %arg5[%c0_6, %c0_7] : memref<64x64xbf16, #tpu.memory_space<vmem>>, vector<64x64xbf16>
    %c0_8 = arith.constant 0 : index
    %c0_9 = arith.constant 0 : index
    %9 = vector.load %arg6[%c0_8, %c0_9] : memref<1x64xf32, #tpu.memory_space<vmem>>, vector<1x64xf32>
    %10 = arith.truncf %7 : vector<128x64xf32> to vector<128x64xbf16>
    %cst_10 = arith.constant dense<0.000000e+00> : vector<128x64xf32>
    %11 = tpu.matmul %10, %8, %cst_10 {dimension_numbers = #tpu.dot_dimension_numbers<[1], [0], [0], [1], [0, 0, 1, 1], [], []>} : vector<128x64xbf16>, vector<64x64xbf16>, vector<128x64xf32> -> vector<128x64xf32>
    %12 = vector.broadcast %9 : vector<1x64xf32> to vector<128x64xf32>
    %13 = arith.addf %11, %12 : vector<128x64xf32>
    %cst_11 = arith.constant 0.000000e+00 : f32
    %14 = vector.broadcast %cst_11 : f32 to vector<128x64xf32>
    %15 = arith.maximumf %13, %14 : vector<128x64xf32>
    %c0_12 = arith.constant 0 : index
    %c0_13 = arith.constant 0 : index
    %16 = vector.load %arg7[%c0_12, %c0_13] : memref<64x64xbf16, #tpu.memory_space<vmem>>, vector<64x64xbf16>
    %c0_14 = arith.constant 0 : index
    %c0_15 = arith.constant 0 : index
    %17 = vector.load %arg8[%c0_14, %c0_15] : memref<1x64xf32, #tpu.memory_space<vmem>>, vector<1x64xf32>
    %18 = arith.truncf %15 : vector<128x64xf32> to vector<128x64xbf16>
    %cst_16 = arith.constant dense<0.000000e+00> : vector<128x64xf32>
    %19 = tpu.matmul %18, %16, %cst_16 {dimension_numbers = #tpu.dot_dimension_numbers<[1], [0], [0], [1], [0, 0, 1, 1], [], []>} : vector<128x64xbf16>, vector<64x64xbf16>, vector<128x64xf32> -> vector<128x64xf32>
    %20 = vector.broadcast %17 : vector<1x64xf32> to vector<128x64xf32>
    %21 = arith.addf %19, %20 : vector<128x64xf32>
    %cst_17 = arith.constant 0.000000e+00 : f32
    %22 = vector.broadcast %cst_17 : f32 to vector<128x64xf32>
    %23 = arith.maximumf %21, %22 : vector<128x64xf32>
    %c0_18 = arith.constant 0 : index
    %c0_19 = arith.constant 0 : index
    %24 = vector.load %arg9[%c0_18, %c0_19] : memref<64x64xbf16, #tpu.memory_space<vmem>>, vector<64x64xbf16>
    %c0_20 = arith.constant 0 : index
    %c0_21 = arith.constant 0 : index
    %25 = vector.load %arg10[%c0_20, %c0_21] : memref<1x64xf32, #tpu.memory_space<vmem>>, vector<1x64xf32>
    %26 = arith.truncf %23 : vector<128x64xf32> to vector<128x64xbf16>
    %cst_22 = arith.constant dense<0.000000e+00> : vector<128x64xf32>
    %27 = tpu.matmul %26, %24, %cst_22 {dimension_numbers = #tpu.dot_dimension_numbers<[1], [0], [0], [1], [0, 0, 1, 1], [], []>} : vector<128x64xbf16>, vector<64x64xbf16>, vector<128x64xf32> -> vector<128x64xf32>
    %28 = vector.broadcast %25 : vector<1x64xf32> to vector<128x64xf32>
    %29 = arith.addf %27, %28 : vector<128x64xf32>
    %cst_23 = arith.constant 0.000000e+00 : f32
    %30 = vector.broadcast %cst_23 : f32 to vector<128x64xf32>
    %31 = arith.maximumf %29, %30 : vector<128x64xf32>
    %c0_24 = arith.constant 0 : index
    %c0_25 = arith.constant 0 : index
    %32 = vector.load %arg11[%c0_24, %c0_25] : memref<64x64xbf16, #tpu.memory_space<vmem>>, vector<64x64xbf16>
    %c0_26 = arith.constant 0 : index
    %c0_27 = arith.constant 0 : index
    %33 = vector.load %arg12[%c0_26, %c0_27] : memref<1x64xf32, #tpu.memory_space<vmem>>, vector<1x64xf32>
    %34 = arith.truncf %31 : vector<128x64xf32> to vector<128x64xbf16>
    %cst_28 = arith.constant dense<0.000000e+00> : vector<128x64xf32>
    %35 = tpu.matmul %34, %32, %cst_28 {dimension_numbers = #tpu.dot_dimension_numbers<[1], [0], [0], [1], [0, 0, 1, 1], [], []>} : vector<128x64xbf16>, vector<64x64xbf16>, vector<128x64xf32> -> vector<128x64xf32>
    %36 = vector.broadcast %33 : vector<1x64xf32> to vector<128x64xf32>
    %37 = arith.addf %35, %36 : vector<128x64xf32>
    %cst_29 = arith.constant 0.000000e+00 : f32
    %38 = vector.broadcast %cst_29 : f32 to vector<128x64xf32>
    %39 = arith.maximumf %37, %38 : vector<128x64xf32>
    %c0_30 = arith.constant 0 : index
    %c0_31 = arith.constant 0 : index
    %40 = vector.load %arg13[%c0_30, %c0_31] : memref<8x64xbf16, #tpu.memory_space<vmem>>, vector<8x64xbf16>
    %c0_32 = arith.constant 0 : index
    %c0_33 = arith.constant 0 : index
    %41 = vector.load %arg14[%c0_32, %c0_33] : memref<64x64xbf16, #tpu.memory_space<vmem>>, vector<64x64xbf16>
    %c0_34 = arith.constant 0 : index
    %c0_35 = arith.constant 0 : index
    %42 = vector.load %arg15[%c0_34, %c0_35] : memref<1x64xf32, #tpu.memory_space<vmem>>, vector<1x64xf32>
    %cst_36 = arith.constant dense<0.000000e+00> : vector<128x64xf32>
    %43 = tpu.matmul %0, %40, %cst_36 {dimension_numbers = #tpu.dot_dimension_numbers<[1], [0], [0], [1], [0, 0, 1, 1], [], []>} : vector<128x8xbf16>, vector<8x64xbf16>, vector<128x64xf32> -> vector<128x64xf32>
    %44 = arith.truncf %39 : vector<128x64xf32> to vector<128x64xbf16>
    %cst_37 = arith.constant dense<0.000000e+00> : vector<128x64xf32>
    %45 = tpu.matmul %44, %41, %cst_37 {dimension_numbers = #tpu.dot_dimension_numbers<[1], [0], [0], [1], [0, 0, 1, 1], [], []>} : vector<128x64xbf16>, vector<64x64xbf16>, vector<128x64xf32> -> vector<128x64xf32>
    %46 = arith.addf %43, %45 : vector<128x64xf32>
    %47 = vector.broadcast %42 : vector<1x64xf32> to vector<128x64xf32>
    %48 = arith.addf %46, %47 : vector<128x64xf32>
    %cst_38 = arith.constant 0.000000e+00 : f32
    %49 = vector.broadcast %cst_38 : f32 to vector<128x64xf32>
    %50 = arith.maximumf %48, %49 : vector<128x64xf32>
    %c0_39 = arith.constant 0 : index
    %c0_40 = arith.constant 0 : index
    %51 = vector.load %arg16[%c0_39, %c0_40] : memref<64x64xbf16, #tpu.memory_space<vmem>>, vector<64x64xbf16>
    %c0_41 = arith.constant 0 : index
    %c0_42 = arith.constant 0 : index
    %52 = vector.load %arg17[%c0_41, %c0_42] : memref<1x64xf32, #tpu.memory_space<vmem>>, vector<1x64xf32>
    %53 = arith.truncf %50 : vector<128x64xf32> to vector<128x64xbf16>
    %cst_43 = arith.constant dense<0.000000e+00> : vector<128x64xf32>
    %54 = tpu.matmul %53, %51, %cst_43 {dimension_numbers = #tpu.dot_dimension_numbers<[1], [0], [0], [1], [0, 0, 1, 1], [], []>} : vector<128x64xbf16>, vector<64x64xbf16>, vector<128x64xf32> -> vector<128x64xf32>
    %55 = vector.broadcast %52 : vector<1x64xf32> to vector<128x64xf32>
    %56 = arith.addf %54, %55 : vector<128x64xf32>
    %cst_44 = arith.constant 0.000000e+00 : f32
    %57 = vector.broadcast %cst_44 : f32 to vector<128x64xf32>
    %58 = arith.maximumf %56, %57 : vector<128x64xf32>
    %c0_45 = arith.constant 0 : index
    %c0_46 = arith.constant 0 : index
    %59 = vector.load %arg18[%c0_45, %c0_46] : memref<64x64xbf16, #tpu.memory_space<vmem>>, vector<64x64xbf16>
    %c0_47 = arith.constant 0 : index
    %c0_48 = arith.constant 0 : index
    %60 = vector.load %arg19[%c0_47, %c0_48] : memref<1x64xf32, #tpu.memory_space<vmem>>, vector<1x64xf32>
    %61 = arith.truncf %58 : vector<128x64xf32> to vector<128x64xbf16>
    %cst_49 = arith.constant dense<0.000000e+00> : vector<128x64xf32>
    %62 = tpu.matmul %61, %59, %cst_49 {dimension_numbers = #tpu.dot_dimension_numbers<[1], [0], [0], [1], [0, 0, 1, 1], [], []>} : vector<128x64xbf16>, vector<64x64xbf16>, vector<128x64xf32> -> vector<128x64xf32>
    %63 = vector.broadcast %60 : vector<1x64xf32> to vector<128x64xf32>
    %64 = arith.addf %62, %63 : vector<128x64xf32>
    %cst_50 = arith.constant 0.000000e+00 : f32
    %65 = vector.broadcast %cst_50 : f32 to vector<128x64xf32>
    %66 = arith.maximumf %64, %65 : vector<128x64xf32>
    %c0_51 = arith.constant 0 : index
    %c0_52 = arith.constant 0 : index
    %67 = vector.load %arg20[%c0_51, %c0_52] : memref<64x8xbf16, #tpu.memory_space<vmem>>, vector<64x8xbf16>
    %c0_53 = arith.constant 0 : index
    %c0_54 = arith.constant 0 : index
    %68 = vector.load %arg21[%c0_53, %c0_54] : memref<1x8xf32, #tpu.memory_space<vmem>>, vector<1x8xf32>
    %69 = arith.truncf %66 : vector<128x64xf32> to vector<128x64xbf16>
    %cst_55 = arith.constant dense<0.000000e+00> : vector<128x8xf32>
    %70 = tpu.matmul %69, %67, %cst_55 {dimension_numbers = #tpu.dot_dimension_numbers<[1], [0], [0], [1], [0, 0, 1, 1], [], []>} : vector<128x64xbf16>, vector<64x8xbf16>, vector<128x8xf32> -> vector<128x8xf32>
    %71 = vector.broadcast %68 : vector<1x8xf32> to vector<128x8xf32>
    %72 = arith.addf %70, %71 : vector<128x8xf32>
    %c0_56 = arith.constant 0 : index
    %c0_57 = arith.constant 0 : index
    %73 = vector.load %arg22[%c0_56, %c0_57] : memref<128x8xf32, #tpu.memory_space<vmem>>, vector<128x8xf32>
    tpu.vector_store %arg22[%c0_56, %c0_57], %72 {strides = array<i32>} : memref<128x8xf32, #tpu.memory_space<vmem>>, vector<128x8xf32>,
    return
  }
  func.func @transform_0(%arg0: i32) -> (i32, i32) {
    %c0_i32 = arith.constant 0 : i32
    %c0_i32_0 = arith.constant 0 : i32
    return %arg0, %c0_i32 : i32, i32
  }
  func.func @transform_1(%arg0: i32) -> (i32, i32) {
    %c0_i32 = arith.constant 0 : i32
    %c0_i32_0 = arith.constant 0 : i32
    return %arg0, %c0_i32 : i32, i32
  }
  func.func @transform_2(%arg0: i32) -> (i32, i32) {
    %c0_i32 = arith.constant 0 : i32
    %c0_i32_0 = arith.constant 0 : i32
    %c0_i32_1 = arith.constant 0 : i32
    return %c0_i32, %c0_i32_0 : i32, i32
  }
  func.func @transform_3(%arg0: i32) -> (i32, i32) {
    %c0_i32 = arith.constant 0 : i32
    %c0_i32_0 = arith.constant 0 : i32
    %c0_i32_1 = arith.constant 0 : i32
    return %c0_i32, %c0_i32_0 : i32, i32
  }
  func.func @transform_4(%arg0: i32) -> (i32, i32) {
    %c0_i32 = arith.constant 0 : i32
    %c0_i32_0 = arith.constant 0 : i32
    %c0_i32_1 = arith.constant 0 : i32
    return %c0_i32, %c0_i32_0 : i32, i32
  }
  func.func @transform_5(%arg0: i32) -> (i32, i32) {
    %c0_i32 = arith.constant 0 : i32
    %c0_i32_0 = arith.constant 0 : i32
    %c0_i32_1 = arith.constant 0 : i32
    return %c0_i32, %c0_i32_0 : i32, i32
  }
  func.func @transform_6(%arg0: i32) -> (i32, i32) {
    %c0_i32 = arith.constant 0 : i32
    %c0_i32_0 = arith.constant 0 : i32
    %c0_i32_1 = arith.constant 0 : i32
    return %c0_i32, %c0_i32_0 : i32, i32
  }
  func.func @transform_7(%arg0: i32) -> (i32, i32) {
    %c0_i32 = arith.constant 0 : i32
    %c0_i32_0 = arith.constant 0 : i32
    %c0_i32_1 = arith.constant 0 : i32
    return %c0_i32, %c0_i32_0 : i32, i32
  }
  func.func @transform_8(%arg0: i32) -> (i32, i32) {
    %c0_i32 = arith.constant 0 : i32
    %c0_i32_0 = arith.constant 0 : i32
    %c0_i32_1 = arith.constant 0 : i32
    return %c0_i32, %c0_i32_0 : i32, i32
  }
  func.func @transform_9(%arg0: i32) -> (i32, i32) {
    %c0_i32 = arith.constant 0 : i32
    %c0_i32_0 = arith.constant 0 : i32
    %c0_i32_1 = arith.constant 0 : i32
    return %c0_i32, %c0_i32_0 : i32, i32
  }
  func.func @transform_10(%arg0: i32) -> (i32, i32) {
    %c0_i32 = arith.constant 0 : i32
    %c0_i32_0 = arith.constant 0 : i32
    %c0_i32_1 = arith.constant 0 : i32
    return %c0_i32, %c0_i32_0 : i32, i32
  }
  func.func @transform_11(%arg0: i32) -> (i32, i32) {
    %c0_i32 = arith.constant 0 : i32
    %c0_i32_0 = arith.constant 0 : i32
    %c0_i32_1 = arith.constant 0 : i32
    return %c0_i32, %c0_i32_0 : i32, i32
  }
  func.func @transform_12(%arg0: i32) -> (i32, i32) {
    %c0_i32 = arith.constant 0 : i32
    %c0_i32_0 = arith.constant 0 : i32
    %c0_i32_1 = arith.constant 0 : i32
    return %c0_i32, %c0_i32_0 : i32, i32
  }
  func.func @transform_13(%arg0: i32) -> (i32, i32) {
    %c0_i32 = arith.constant 0 : i32
    %c0_i32_0 = arith.constant 0 : i32
    %c0_i32_1 = arith.constant 0 : i32
    return %c0_i32, %c0_i32_0 : i32, i32
  }
  func.func @transform_14(%arg0: i32) -> (i32, i32) {
    %c0_i32 = arith.constant 0 : i32
    %c0_i32_0 = arith.constant 0 : i32
    %c0_i32_1 = arith.constant 0 : i32
    return %c0_i32, %c0_i32_0 : i32, i32
  }
  func.func @transform_15(%arg0: i32) -> (i32, i32) {
    %c0_i32 = arith.constant 0 : i32
    %c0_i32_0 = arith.constant 0 : i32
    %c0_i32_1 = arith.constant 0 : i32
    return %c0_i32, %c0_i32_0 : i32, i32
  }
  func.func @transform_16(%arg0: i32) -> (i32, i32) {
    %c0_i32 = arith.constant 0 : i32
    %c0_i32_0 = arith.constant 0 : i32
    %c0_i32_1 = arith.constant 0 : i32
    return %c0_i32, %c0_i32_0 : i32, i32
  }
  func.func @transform_17(%arg0: i32) -> (i32, i32) {
    %c0_i32 = arith.constant 0 : i32
    %c0_i32_0 = arith.constant 0 : i32
    %c0_i32_1 = arith.constant 0 : i32
    return %c0_i32, %c0_i32_0 : i32, i32
  }
  func.func @transform_18(%arg0: i32) -> (i32, i32) {
    %c0_i32 = arith.constant 0 : i32
    %c0_i32_0 = arith.constant 0 : i32
    %c0_i32_1 = arith.constant 0 : i32
    return %c0_i32, %c0_i32_0 : i32, i32
  }
  func.func @transform_19(%arg0: i32) -> (i32, i32) {
    %c0_i32 = arith.constant 0 : i32
    %c0_i32_0 = arith.constant 0 : i32
    %c0_i32_1 = arith.constant 0 : i32
    return %c0_i32, %c0_i32_0 : i32, i32
  }
  func.func @transform_20(%arg0: i32) -> (i32, i32) {
    %c0_i32 = arith.constant 0 : i32
    %c0_i32_0 = arith.constant 0 : i32
    %c0_i32_1 = arith.constant 0 : i32
    return %c0_i32, %c0_i32_0 : i32, i32
  }
  func.func @transform_21(%arg0: i32) -> (i32, i32) {
    %c0_i32 = arith.constant 0 : i32
    %c0_i32_0 = arith.constant 0 : i32
    return %arg0, %c0_i32 : i32, i32
  }
}

</mosaic_0001>

<llo_original>
// kernel: tpu_custom_call.1
$region0: #{tpu_custom_call.1}
  #allocation0 [shape = 'u32[]', space=smem, size = 0x4, offset = 0x4, fixed_abs, tag = 'smem constant byte address 0x4 - core index']
  #allocation1 [shape = 'u32[144,128]{1,0:T(1,128)}', space=vmem, size = 0x12000, scoped, tag = 'internal scratch']
  %s0 = inlined_call_operand.vmem [shape: bf16[256,8], index: 0, kind: input, shape index: {}]
  %s1 = inlined_call_operand.vmem [shape: bf16[256,8], index: 1, kind: input, shape index: {}]
  %s2 = inlined_call_operand.vmem [shape: bf16[8,64], index: 2, kind: input, shape index: {}]
  %s3 = inlined_call_operand.vmem [shape: f32[1,64], index: 3, kind: input, shape index: {}]
  %s4 = inlined_call_operand.vmem [shape: bf16[64,64], index: 4, kind: input, shape index: {}]
  %s5 = inlined_call_operand.vmem [shape: f32[1,64], index: 5, kind: input, shape index: {}]
  %s6 = inlined_call_operand.vmem [shape: bf16[64,64], index: 6, kind: input, shape index: {}]
  %s7 = inlined_call_operand.vmem [shape: f32[1,64], index: 7, kind: input, shape index: {}]
  %s8 = inlined_call_operand.vmem [shape: bf16[64,64], index: 8, kind: input, shape index: {}]
  %s9 = inlined_call_operand.vmem [shape: f32[1,64], index: 9, kind: input, shape index: {}]
  %s10 = inlined_call_operand.vmem [shape: bf16[64,64], index: 10, kind: input, shape index: {}]
  %s11 = inlined_call_operand.vmem [shape: f32[1,64], index: 11, kind: input, shape index: {}]
  %s12 = inlined_call_operand.vmem [shape: bf16[8,64], index: 12, kind: input, shape index: {}]
  %s13 = inlined_call_operand.vmem [shape: bf16[64,64], index: 13, kind: input, shape index: {}]
  %s14 = inlined_call_operand.vmem [shape: f32[1,64], index: 14, kind: input, shape index: {}]
  %s15 = inlined_call_operand.vmem [shape: bf16[64,64], index: 15, kind: input, shape index: {}]
  %s16 = inlined_call_operand.vmem [shape: f32[1,64], index: 16, kind: input, shape index: {}]
  %s17 = inlined_call_operand.vmem [shape: bf16[64,64], index: 17, kind: input, shape index: {}]
  %s18 = inlined_call_operand.vmem [shape: f32[1,64], index: 18, kind: input, shape index: {}]
  %s19 = inlined_call_operand.vmem [shape: bf16[64,8], index: 19, kind: input, shape index: {}]
  %s20 = inlined_call_operand.vmem [shape: f32[1,8], index: 20, kind: input, shape index: {}]
  %s21 = inlined_call_operand.vmem [shape: f32[256,8], index: 21, kind: output, shape index: {}]
  %s22 = sld [smem:[#allocation0]]
  $region117: #{tpu_custom_call.1} parent=0
    _
  %s24 = ssub.s32 1, %s22
  %s25 = scalar_select 0, %s24, %s22
  loop: start=0, step=1, limit=4
  $region2: #{tpu_custom_call.1} parent=0 // loop_pre_header
    _
  $region3: #{tpu_custom_call.1} parent=0 // loop_header
    %s27 = sphi 0, %s31
    %p28 = scmp.ge.s32.totalorder %s27, 4
    %s37 = sphi 0, %s39
    %s40 = sphi 0, %s37
    %s41 = sphi 0, %s40
    %s57 = sphi 0, %s41
    %s63 = sphi 0, %s65
    %s66 = sphi 0, %s63
    %s67 = sphi 0, %s66
    %s83 = sphi 0, %s67
    %s87 = sphi 0, %s87
    %s89 = sphi 0, %s87
    %s90 = sphi 0, %s89
    %s104 = sphi 0, %s90
    %s108 = sphi 0, %s108
    %s110 = sphi 0, %s108
    %s111 = sphi 0, %s110
    %s125 = sphi 0, %s111
    %s129 = sphi 0, %s129
    %s131 = sphi 0, %s129
    %s132 = sphi 0, %s131
    %s146 = sphi 0, %s132
    %s150 = sphi 0, %s150
    %s152 = sphi 0, %s150
    %s153 = sphi 0, %s152
    %s167 = sphi 0, %s153
    %s171 = sphi 0, %s171
    %s173 = sphi 0, %s171
    %s174 = sphi 0, %s173
    %s188 = sphi 0, %s174
    %s192 = sphi 0, %s192
    %s194 = sphi 0, %s192
    %s195 = sphi 0, %s194
    %s209 = sphi 0, %s195
    %s213 = sphi 0, %s213
    %s215 = sphi 0, %s213
    %s216 = sphi 0, %s215
    %s230 = sphi 0, %s216
    %s234 = sphi 0, %s234
    %s236 = sphi 0, %s234
    %s237 = sphi 0, %s236
    %s251 = sphi 0, %s237
    %s255 = sphi 0, %s255
    %s257 = sphi 0, %s255
    %s258 = sphi 0, %s257
    %s272 = sphi 0, %s258
    %s276 = sphi 0, %s276
    %s278 = sphi 0, %s276
    %s279 = sphi 0, %s278
    %s293 = sphi 0, %s279
    %s297 = sphi 0, %s297
    %s299 = sphi 0, %s297
    %s300 = sphi 0, %s299
    %s314 = sphi 0, %s300
    %s318 = sphi 0, %s318
    %s320 = sphi 0, %s318
    %s321 = sphi 0, %s320
    %s335 = sphi 0, %s321
    %s339 = sphi 0, %s339
    %s341 = sphi 0, %s339
    %s342 = sphi 0, %s341
    %s356 = sphi 0, %s342
    %s360 = sphi 0, %s360
    %s362 = sphi 0, %s360
    %s363 = sphi 0, %s362
    %s377 = sphi 0, %s363
    %s381 = sphi 0, %s381
    %s383 = sphi 0, %s381
    %s384 = sphi 0, %s383
    %s398 = sphi 0, %s384
    %s402 = sphi 0, %s402
    %s404 = sphi 0, %s402
    %s405 = sphi 0, %s404
    %s419 = sphi 0, %s405
    %s423 = sphi 0, %s423
    %s425 = sphi 0, %s423
    %s426 = sphi 0, %s425
    %s440 = sphi 0, %s426
    %s444 = sphi 0, %s444
    %s446 = sphi 0, %s444
    %s447 = sphi 0, %s446
    %s461 = sphi 0, %s447
    %s465 = sphi 0, %s465
    %s467 = sphi 0, %s465
    %s468 = sphi 0, %s467
    %s482 = sphi 0, %s468
    %s488 = sphi 0, %s490
    %s491 = sphi 0, %s488
    %s492 = sphi 0, %s491
    %s508 = sphi 0, %s492
  $region4: #{tpu_custom_call.1} parent=0 // loop_header_branch
    %30 = sbr.rel (%p28) target = $region8
  $region5: #{tpu_custom_call.1} parent=0 // loop_body
    %s32 = ssub.s32 %s27, 1
    %s33 = ssub.s32 %s27, 2
    %s34 = sadd.s32 %s27, 1
    %s35 = ssub.s32 %s27, %s34
    %p36 = scmp.eq.s32.totalorder %s35, 0
    %s38 = sadd.s32 %s37, 1
    %s39 = scalar_select %p36, %s37, %s38
    %p42 = pneg %p36
    %p43 = scmp.eq.s32.totalorder %s27, 1
    %p44 = por %p42, %p43
    %p45 = scmp.ne.s32.totalorder %s37, %s40
    %p46 = scmp.eq.s32.totalorder %s27, 0
    %p47 = por %p45, %p46
    %p48 = scmp.ne.s32.totalorder %s37, %s40
    %p49 = scmp.eq.s32.totalorder %s32, 1
    %p50 = por %p48, %p49
    %p51 = scmp.ne.s32.totalorder %s40, %s41
    %p52 = scmp.eq.s32.totalorder %s32, 0
    %p53 = por %p51, %p52
    %p54 = scmp.ne.s32.totalorder %s40, %s41
    %p55 = scmp.eq.s32.totalorder %s33, 1
    %p56 = por %p54, %p55
    %p58 = scmp.ne.s32.totalorder %s41, %s57
    %p59 = scmp.eq.s32.totalorder %s33, 0
    %p60 = por %p58, %p59
    %s61 = ssub.s32 %s27, %s34
    %p62 = scmp.eq.s32.totalorder %s61, 0
    %s64 = sadd.s32 %s63, 1
    %s65 = scalar_select %p62, %s63, %s64
    %p68 = pneg %p62
    %p69 = scmp.eq.s32.totalorder %s27, 1
    %p70 = por %p68, %p69
    %p71 = scmp.ne.s32.totalorder %s63, %s66
    %p72 = scmp.eq.s32.totalorder %s27, 0
    %p73 = por %p71, %p72
    %p74 = scmp.ne.s32.totalorder %s63, %s66
    %p75 = scmp.eq.s32.totalorder %s32, 1
    %p76 = por %p74, %p75
    %p77 = scmp.ne.s32.totalorder %s66, %s67
    %p78 = scmp.eq.s32.totalorder %s32, 0
    %p79 = por %p77, %p78
    %p80 = scmp.ne.s32.totalorder %s66, %s67
    %p81 = scmp.eq.s32.totalorder %s33, 1
    %p82 = por %p80, %p81
    %p84 = scmp.ne.s32.totalorder %s67, %s83
    %p85 = scmp.eq.s32.totalorder %s33, 0
    %p86 = por %p84, %p85
    %s88 = sadd.s32 %s87, 1
    %p91 = scmp.eq.s32.totalorder %s27, 1
    %p92 = scmp.ne.s32.totalorder %s87, %s89
    %p93 = scmp.eq.s32.totalorder %s27, 0
    %p94 = por %p92, %p93
    %p95 = scmp.ne.s32.totalorder %s87, %s89
    %p96 = scmp.eq.s32.totalorder %s32, 1
    %p97 = por %p95, %p96
    %p98 = scmp.ne.s32.totalorder %s89, %s90
    %p99 = scmp.eq.s32.totalorder %s32, 0
    %p100 = por %p98, %p99
    %p101 = scmp.ne.s32.totalorder %s89, %s90
    %p102 = scmp.eq.s32.totalorder %s33, 1
    %p103 = por %p101, %p102
    %p105 = scmp.ne.s32.totalorder %s90, %s104
    %p106 = scmp.eq.s32.totalorder %s33, 0
    %p107 = por %p105, %p106
    %s109 = sadd.s32 %s108, 1
    %p112 = scmp.eq.s32.totalorder %s27, 1
    %p113 = scmp.ne.s32.totalorder %s108, %s110
    %p114 = scmp.eq.s32.totalorder %s27, 0
    %p115 = por %p113, %p114
    %p116 = scmp.ne.s32.totalorder %s108, %s110
    %p117 = scmp.eq.s32.totalorder %s32, 1
    %p118 = por %p116, %p117
    %p119 = scmp.ne.s32.totalorder %s110, %s111
    %p120 = scmp.eq.s32.totalorder %s32, 0
    %p121 = por %p119, %p120
    %p122 = scmp.ne.s32.totalorder %s110, %s111
    %p123 = scmp.eq.s32.totalorder %s33, 1
    %p124 = por %p122, %p123
    %p126 = scmp.ne.s32.totalorder %s111, %s125
    %p127 = scmp.eq.s32.totalorder %s33, 0
    %p128 = por %p126, %p127
    %s130 = sadd.s32 %s129, 1
    %p133 = scmp.eq.s32.totalorder %s27, 1
    %p134 = scmp.ne.s32.totalorder %s129, %s131
    %p135 = scmp.eq.s32.totalorder %s27, 0
    %p136 = por %p134, %p135
    %p137 = scmp.ne.s32.totalorder %s129, %s131
    %p138 = scmp.eq.s32.totalorder %s32, 1
    %p139 = por %p137, %p138
    %p140 = scmp.ne.s32.totalorder %s131, %s132
    %p141 = scmp.eq.s32.totalorder %s32, 0
    %p142 = por %p140, %p141
    %p143 = scmp.ne.s32.totalorder %s131, %s132
    %p144 = scmp.eq.s32.totalorder %s33, 1
    %p145 = por %p143, %p144
    %p147 = scmp.ne.s32.totalorder %s132, %s146
    %p148 = scmp.eq.s32.totalorder %s33, 0
    %p149 = por %p147, %p148
    %s151 = sadd.s32 %s150, 1
    %p154 = scmp.eq.s32.totalorder %s27, 1
    %p155 = scmp.ne.s32.totalorder %s150, %s152
    %p156 = scmp.eq.s32.totalorder %s27, 0
    %p157 = por %p155, %p156
    %p158 = scmp.ne.s32.totalorder %s150, %s152
    %p159 = scmp.eq.s32.totalorder %s32, 1
    %p160 = por %p158, %p159
    %p161 = scmp.ne.s32.totalorder %s152, %s153
    %p162 = scmp.eq.s32.totalorder %s32, 0
    %p163 = por %p161, %p162
    %p164 = scmp.ne.s32.totalorder %s152, %s153
    %p165 = scmp.eq.s32.totalorder %s33, 1
    %p166 = por %p164, %p165
    %p168 = scmp.ne.s32.totalorder %s153, %s167
    %p169 = scmp.eq.s32.totalorder %s33, 0
    %p170 = por %p168, %p169
    %s172 = sadd.s32 %s171, 1
    %p175 = scmp.eq.s32.totalorder %s27, 1
    %p176 = scmp.ne.s32.totalorder %s171, %s173
    %p177 = scmp.eq.s32.totalorder %s27, 0
    %p178 = por %p176, %p177
    %p179 = scmp.ne.s32.totalorder %s171, %s173
    %p180 = scmp.eq.s32.totalorder %s32, 1
    %p181 = por %p179, %p180
    %p182 = scmp.ne.s32.totalorder %s173, %s174
    %p183 = scmp.eq.s32.totalorder %s32, 0
    %p184 = por %p182, %p183
    %p185 = scmp.ne.s32.totalorder %s173, %s174
    %p186 = scmp.eq.s32.totalorder %s33, 1
    %p187 = por %p185, %p186
    %p189 = scmp.ne.s32.totalorder %s174, %s188
    %p190 = scmp.eq.s32.totalorder %s33, 0
    %p191 = por %p189, %p190
    %s193 = sadd.s32 %s192, 1
    %p196 = scmp.eq.s32.totalorder %s27, 1
    %p197 = scmp.ne.s32.totalorder %s192, %s194
    %p198 = scmp.eq.s32.totalorder %s27, 0
    %p199 = por %p197, %p198
    %p200 = scmp.ne.s32.totalorder %s192, %s194
    %p201 = scmp.eq.s32.totalorder %s32, 1
    %p202 = por %p200, %p201
    %p203 = scmp.ne.s32.totalorder %s194, %s195
    %p204 = scmp.eq.s32.totalorder %s32, 0
    %p205 = por %p203, %p204
    %p206 = scmp.ne.s32.totalorder %s194, %s195
    %p207 = scmp.eq.s32.totalorder %s33, 1
    %p208 = por %p206, %p207
    %p210 = scmp.ne.s32.totalorder %s195, %s209
    %p211 = scmp.eq.s32.totalorder %s33, 0
    %p212 = por %p210, %p211
    %s214 = sadd.s32 %s213, 1
    %p217 = scmp.eq.s32.totalorder %s27, 1
    %p218 = scmp.ne.s32.totalorder %s213, %s215
    %p219 = scmp.eq.s32.totalorder %s27, 0
    %p220 = por %p218, %p219
    %p221 = scmp.ne.s32.totalorder %s213, %s215
    %p222 = scmp.eq.s32.totalorder %s32, 1
    %p223 = por %p221, %p222
    %p224 = scmp.ne.s32.totalorder %s215, %s216
    %p225 = scmp.eq.s32.totalorder %s32, 0
    %p226 = por %p224, %p225
    %p227 = scmp.ne.s32.totalorder %s215, %s216
    %p228 = scmp.eq.s32.totalorder %s33, 1
    %p229 = por %p227, %p228
    %p231 = scmp.ne.s32.totalorder %s216, %s230
    %p232 = scmp.eq.s32.totalorder %s33, 0
    %p233 = por %p231, %p232
    %s235 = sadd.s32 %s234, 1
    %p238 = scmp.eq.s32.totalorder %s27, 1
    %p239 = scmp.ne.s32.totalorder %s234, %s236
    %p240 = scmp.eq.s32.totalorder %s27, 0
    %p241 = por %p239, %p240
    %p242 = scmp.ne.s32.totalorder %s234, %s236
    %p243 = scmp.eq.s32.totalorder %s32, 1
    %p244 = por %p242, %p243
    %p245 = scmp.ne.s32.totalorder %s236, %s237
    %p246 = scmp.eq.s32.totalorder %s32, 0
    %p247 = por %p245, %p246
    %p248 = scmp.ne.s32.totalorder %s236, %s237
    %p249 = scmp.eq.s32.totalorder %s33, 1
    %p250 = por %p248, %p249
    %p252 = scmp.ne.s32.totalorder %s237, %s251
    %p253 = scmp.eq.s32.totalorder %s33, 0
    %p254 = por %p252, %p253
    %s256 = sadd.s32 %s255, 1
    %p259 = scmp.eq.s32.totalorder %s27, 1
    %p260 = scmp.ne.s32.totalorder %s255, %s257
    %p261 = scmp.eq.s32.totalorder %s27, 0
    %p262 = por %p260, %p261
    %p263 = scmp.ne.s32.totalorder %s255, %s257
    %p264 = scmp.eq.s32.totalorder %s32, 1
    %p265 = por %p263, %p264
    %p266 = scmp.ne.s32.totalorder %s257, %s258
    %p267 = scmp.eq.s32.totalorder %s32, 0
    %p268 = por %p266, %p267
    %p269 = scmp.ne.s32.totalorder %s257, %s258
    %p270 = scmp.eq.s32.totalorder %s33, 1
    %p271 = por %p269, %p270
    %p273 = scmp.ne.s32.totalorder %s258, %s272
    %p274 = scmp.eq.s32.totalorder %s33, 0
    %p275 = por %p273, %p274
    %s277 = sadd.s32 %s276, 1
    %p280 = scmp.eq.s32.totalorder %s27, 1
    %p281 = scmp.ne.s32.totalorder %s276, %s278
    %p282 = scmp.eq.s32.totalorder %s27, 0
    %p283 = por %p281, %p282
    %p284 = scmp.ne.s32.totalorder %s276, %s278
    %p285 = scmp.eq.s32.totalorder %s32, 1
    %p286 = por %p284, %p285
    %p287 = scmp.ne.s32.totalorder %s278, %s279
    %p288 = scmp.eq.s32.totalorder %s32, 0
    %p289 = por %p287, %p288
    %p290 = scmp.ne.s32.totalorder %s278, %s279
    %p291 = scmp.eq.s32.totalorder %s33, 1
    %p292 = por %p290, %p291
    %p294 = scmp.ne.s32.totalorder %s279, %s293
    %p295 = scmp.eq.s32.totalorder %s33, 0
    %p296 = por %p294, %p295
    %s298 = sadd.s32 %s297, 1
    %p301 = scmp.eq.s32.totalorder %s27, 1
    %p302 = scmp.ne.s32.totalorder %s297, %s299
    %p303 = scmp.eq.s32.totalorder %s27, 0
    %p304 = por %p302, %p303
    %p305 = scmp.ne.s32.totalorder %s297, %s299
    %p306 = scmp.eq.s32.totalorder %s32, 1
    %p307 = por %p305, %p306
    %p308 = scmp.ne.s32.totalorder %s299, %s300
    %p309 = scmp.eq.s32.totalorder %s32, 0
    %p310 = por %p308, %p309
    %p311 = scmp.ne.s32.totalorder %s299, %s300
    %p312 = scmp.eq.s32.totalorder %s33, 1
    %p313 = por %p311, %p312
    %p315 = scmp.ne.s32.totalorder %s300, %s314
    %p316 = scmp.eq.s32.totalorder %s33, 0
    %p317 = por %p315, %p316
    %s319 = sadd.s32 %s318, 1
    %p322 = scmp.eq.s32.totalorder %s27, 1
    %p323 = scmp.ne.s32.totalorder %s318, %s320
    %p324 = scmp.eq.s32.totalorder %s27, 0
    %p325 = por %p323, %p324
    %p326 = scmp.ne.s32.totalorder %s318, %s320
    %p327 = scmp.eq.s32.totalorder %s32, 1
    %p328 = por %p326, %p327
    %p329 = scmp.ne.s32.totalorder %s320, %s321
    %p330 = scmp.eq.s32.totalorder %s32, 0
    %p331 = por %p329, %p330
    %p332 = scmp.ne.s32.totalorder %s320, %s321
    %p333 = scmp.eq.s32.totalorder %s33, 1
    %p334 = por %p332, %p333
    %p336 = scmp.ne.s32.totalorder %s321, %s335
    %p337 = scmp.eq.s32.totalorder %s33, 0
    %p338 = por %p336, %p337
    %s340 = sadd.s32 %s339, 1
    %p343 = scmp.eq.s32.totalorder %s27, 1
    %p344 = scmp.ne.s32.totalorder %s339, %s341
    %p345 = scmp.eq.s32.totalorder %s27, 0
    %p346 = por %p344, %p345
    %p347 = scmp.ne.s32.totalorder %s339, %s341
    %p348 = scmp.eq.s32.totalorder %s32, 1
    %p349 = por %p347, %p348
    %p350 = scmp.ne.s32.totalorder %s341, %s342
    %p351 = scmp.eq.s32.totalorder %s32, 0
    %p352 = por %p350, %p351
    %p353 = scmp.ne.s32.totalorder %s341, %s342
    %p354 = scmp.eq.s32.totalorder %s33, 1
    %p355 = por %p353, %p354
    %p357 = scmp.ne.s32.totalorder %s342, %s356
    %p358 = scmp.eq.s32.totalorder %s33, 0
    %p359 = por %p357, %p358
    %s361 = sadd.s32 %s360, 1
    %p364 = scmp.eq.s32.totalorder %s27, 1
    %p365 = scmp.ne.s32.totalorder %s360, %s362
    %p366 = scmp.eq.s32.totalorder %s27, 0
    %p367 = por %p365, %p366
    %p368 = scmp.ne.s32.totalorder %s360, %s362
    %p369 = scmp.eq.s32.totalorder %s32, 1
    %p370 = por %p368, %p369
    %p371 = scmp.ne.s32.totalorder %s362, %s363
    %p372 = scmp.eq.s32.totalorder %s32, 0
    %p373 = por %p371, %p372
    %p374 = scmp.ne.s32.totalorder %s362, %s363
    %p375 = scmp.eq.s32.totalorder %s33, 1
    %p376 = por %p374, %p375
    %p378 = scmp.ne.s32.totalorder %s363, %s377
    %p379 = scmp.eq.s32.totalorder %s33, 0
    %p380 = por %p378, %p379
    %s382 = sadd.s32 %s381, 1
    %p385 = scmp.eq.s32.totalorder %s27, 1
    %p386 = scmp.ne.s32.totalorder %s381, %s383
    %p387 = scmp.eq.s32.totalorder %s27, 0
    %p388 = por %p386, %p387
    %p389 = scmp.ne.s32.totalorder %s381, %s383
    %p390 = scmp.eq.s32.totalorder %s32, 1
    %p391 = por %p389, %p390
    %p392 = scmp.ne.s32.totalorder %s383, %s384
    %p393 = scmp.eq.s32.totalorder %s32, 0
    %p394 = por %p392, %p393
    %p395 = scmp.ne.s32.totalorder %s383, %s384
    %p396 = scmp.eq.s32.totalorder %s33, 1
    %p397 = por %p395, %p396
    %p399 = scmp.ne.s32.totalorder %s384, %s398
    %p400 = scmp.eq.s32.totalorder %s33, 0
    %p401 = por %p399, %p400
    %s403 = sadd.s32 %s402, 1
    %p406 = scmp.eq.s32.totalorder %s27, 1
    %p407 = scmp.ne.s32.totalorder %s402, %s404
    %p408 = scmp.eq.s32.totalorder %s27, 0
    %p409 = por %p407, %p408
    %p410 = scmp.ne.s32.totalorder %s402, %s404
    %p411 = scmp.eq.s32.totalorder %s32, 1
    %p412 = por %p410, %p411
    %p413 = scmp.ne.s32.totalorder %s404, %s405
    %p414 = scmp.eq.s32.totalorder %s32, 0
    %p415 = por %p413, %p414
    %p416 = scmp.ne.s32.totalorder %s404, %s405
    %p417 = scmp.eq.s32.totalorder %s33, 1
    %p418 = por %p416, %p417
    %p420 = scmp.ne.s32.totalorder %s405, %s419
    %p421 = scmp.eq.s32.totalorder %s33, 0
    %p422 = por %p420, %p421
    %s424 = sadd.s32 %s423, 1
    %p427 = scmp.eq.s32.totalorder %s27, 1
    %p428 = scmp.ne.s32.totalorder %s423, %s425
    %p429 = scmp.eq.s32.totalorder %s27, 0
    %p430 = por %p428, %p429
    %p431 = scmp.ne.s32.totalorder %s423, %s425
    %p432 = scmp.eq.s32.totalorder %s32, 1
    %p433 = por %p431, %p432
    %p434 = scmp.ne.s32.totalorder %s425, %s426
    %p435 = scmp.eq.s32.totalorder %s32, 0
    %p436 = por %p434, %p435
    %p437 = scmp.ne.s32.totalorder %s425, %s426
    %p438 = scmp.eq.s32.totalorder %s33, 1
    %p439 = por %p437, %p438
    %p441 = scmp.ne.s32.totalorder %s426, %s440
    %p442 = scmp.eq.s32.totalorder %s33, 0
    %p443 = por %p441, %p442
    %s445 = sadd.s32 %s444, 1
    %p448 = scmp.eq.s32.totalorder %s27, 1
    %p449 = scmp.ne.s32.totalorder %s444, %s446
    %p450 = scmp.eq.s32.totalorder %s27, 0
    %p451 = por %p449, %p450
    %p452 = scmp.ne.s32.totalorder %s444, %s446
    %p453 = scmp.eq.s32.totalorder %s32, 1
    %p454 = por %p452, %p453
    %p455 = scmp.ne.s32.totalorder %s446, %s447
    %p456 = scmp.eq.s32.totalorder %s32, 0
    %p457 = por %p455, %p456
    %p458 = scmp.ne.s32.totalorder %s446, %s447
    %p459 = scmp.eq.s32.totalorder %s33, 1
    %p460 = por %p458, %p459
    %p462 = scmp.ne.s32.totalorder %s447, %s461
    %p463 = scmp.eq.s32.totalorder %s33, 0
    %p464 = por %p462, %p463
    %s466 = sadd.s32 %s465, 1
    %p469 = scmp.eq.s32.totalorder %s27, 1
    %p470 = scmp.ne.s32.totalorder %s465, %s467
    %p471 = scmp.eq.s32.totalorder %s27, 0
    %p472 = por %p470, %p471
    %p473 = scmp.ne.s32.totalorder %s465, %s467
    %p474 = scmp.eq.s32.totalorder %s32, 1
    %p475 = por %p473, %p474
    %p476 = scmp.ne.s32.totalorder %s467, %s468
    %p477 = scmp.eq.s32.totalorder %s32, 0
    %p478 = por %p476, %p477
    %p479 = scmp.ne.s32.totalorder %s467, %s468
    %p480 = scmp.eq.s32.totalorder %s33, 1
    %p481 = por %p479, %p480
    %p483 = scmp.ne.s32.totalorder %s468, %s482
    %p484 = scmp.eq.s32.totalorder %s33, 0
    %p485 = por %p483, %p484
    %s486 = ssub.s32 %s27, %s34
    %p487 = scmp.eq.s32.totalorder %s486, 0
    %s489 = sadd.s32 %s488, 1
    %s490 = scalar_select %p487, %s488, %s489
    %p493 = pneg %p487
    %p494 = scmp.eq.s32.totalorder %s27, 1
    %p495 = por %p493, %p494
    %p496 = scmp.ne.s32.totalorder %s488, %s491
    %p497 = scmp.eq.s32.totalorder %s27, 0
    %p498 = por %p496, %p497
    %p499 = scmp.ne.s32.totalorder %s488, %s491
    %p500 = scmp.eq.s32.totalorder %s32, 1
    %p501 = por %p499, %p500
    %p502 = scmp.ne.s32.totalorder %s491, %s492
    %p503 = scmp.eq.s32.totalorder %s32, 0
    %p504 = por %p502, %p503
    %p505 = scmp.ne.s32.totalorder %s491, %s492
    %p506 = scmp.eq.s32.totalorder %s33, 1
    %p507 = por %p505, %p506
    %p509 = scmp.ne.s32.totalorder %s492, %s508
    %p510 = scmp.eq.s32.totalorder %s33, 0
    %p511 = por %p509, %p510
    %p512 = scmp.le.s32.totalorder 1, %s27
    %p513 = scmp.lt.s32.totalorder %s27, 3
    %p514 = pnand %p512, %p513
    %p515 = pneg %p514
    // Predicated region
    $region9: #{tpu_custom_call.1} parent=5 // pred_check
      _
    $region10: #{tpu_custom_call.1} parent=5 // pred_check_branch
      %517 = sbr.rel (%p514) target = $region12
    $region11: #{tpu_custom_call.1} parent=5 // pred_region
      %s518 = ssub.s32 %s27, 1
      // Predicated region
      $region13: #{tpu_custom_call.1} parent=11 // pred_check
        %p519 = pneg %p100
      $region14: #{tpu_custom_call.1} parent=11 // pred_check_branch
        %521 = sbr.rel (%p519) target = $region16
      $region15: #{tpu_custom_call.1} parent=11 // pred_region
        _
      $region16: #{tpu_custom_call.1} parent=11 // pred_fallthru
        _
      // Predicated region
      $region17: #{tpu_custom_call.1} parent=11 // pred_check
        %p522 = pneg %p121
      $region18: #{tpu_custom_call.1} parent=11 // pred_check_branch
        %524 = sbr.rel (%p522) target = $region20
      $region19: #{tpu_custom_call.1} parent=11 // pred_region
        _
      $region20: #{tpu_custom_call.1} parent=11 // pred_fallthru
        _
      // Predicated region
      $region21: #{tpu_custom_call.1} parent=11 // pred_check
        %p525 = pneg %p142
      $region22: #{tpu_custom_call.1} parent=11 // pred_check_branch
        %527 = sbr.rel (%p525) target = $region24
      $region23: #{tpu_custom_call.1} parent=11 // pred_region
        _
      $region24: #{tpu_custom_call.1} parent=11 // pred_fallthru
        _
      // Predicated region
      $region25: #{tpu_custom_call.1} parent=11 // pred_check
        %p528 = pneg %p163
      $region26: #{tpu_custom_call.1} parent=11 // pred_check_branch
        %530 = sbr.rel (%p528) target = $region28
      $region27: #{tpu_custom_call.1} parent=11 // pred_region
        _
      $region28: #{tpu_custom_call.1} parent=11 // pred_fallthru
        _
      // Predicated region
      $region29: #{tpu_custom_call.1} parent=11 // pred_check
        %p531 = pneg %p184
      $region30: #{tpu_custom_call.1} parent=11 // pred_check_branch
        %533 = sbr.rel (%p531) target = $region32
      $region31: #{tpu_custom_call.1} parent=11 // pred_region
        _
      $region32: #{tpu_custom_call.1} parent=11 // pred_fallthru
        _
      // Predicated region
      $region33: #{tpu_custom_call.1} parent=11 // pred_check
        %p534 = pneg %p205
      $region34: #{tpu_custom_call.1} parent=11 // pred_check_branch
        %536 = sbr.rel (%p534) target = $region36
      $region35: #{tpu_custom_call.1} parent=11 // pred_region
        _
      $region36: #{tpu_custom_call.1} parent=11 // pred_fallthru
        _
      // Predicated region
      $region37: #{tpu_custom_call.1} parent=11 // pred_check
        %p537 = pneg %p226
      $region38: #{tpu_custom_call.1} parent=11 // pred_check_branch
        %539 = sbr.rel (%p537) target = $region40
      $region39: #{tpu_custom_call.1} parent=11 // pred_region
        _
      $region40: #{tpu_custom_call.1} parent=11 // pred_fallthru
        _
      // Predicated region
      $region41: #{tpu_custom_call.1} parent=11 // pred_check
        %p540 = pneg %p247
      $region42: #{tpu_custom_call.1} parent=11 // pred_check_branch
        %542 = sbr.rel (%p540) target = $region44
      $region43: #{tpu_custom_call.1} parent=11 // pred_region
        _
      $region44: #{tpu_custom_call.1} parent=11 // pred_fallthru
        _
      // Predicated region
      $region45: #{tpu_custom_call.1} parent=11 // pred_check
        %p543 = pneg %p268
      $region46: #{tpu_custom_call.1} parent=11 // pred_check_branch
        %545 = sbr.rel (%p543) target = $region48
      $region47: #{tpu_custom_call.1} parent=11 // pred_region
        _
      $region48: #{tpu_custom_call.1} parent=11 // pred_fallthru
        _
      // Predicated region
      $region49: #{tpu_custom_call.1} parent=11 // pred_check
        %p546 = pneg %p289
      $region50: #{tpu_custom_call.1} parent=11 // pred_check_branch
        %548 = sbr.rel (%p546) target = $region52
      $region51: #{tpu_custom_call.1} parent=11 // pred_region
        _
      $region52: #{tpu_custom_call.1} parent=11 // pred_fallthru
        _
      // Predicated region
      $region53: #{tpu_custom_call.1} parent=11 // pred_check
        %p549 = pneg %p310
      $region54: #{tpu_custom_call.1} parent=11 // pred_check_branch
        %551 = sbr.rel (%p549) target = $region56
      $region55: #{tpu_custom_call.1} parent=11 // pred_region
        _
      $region56: #{tpu_custom_call.1} parent=11 // pred_fallthru
        _
      // Predicated region
      $region57: #{tpu_custom_call.1} parent=11 // pred_check
        %p552 = pneg %p331
      $region58: #{tpu_custom_call.1} parent=11 // pred_check_branch
        %554 = sbr.rel (%p552) target = $region60
      $region59: #{tpu_custom_call.1} parent=11 // pred_region
        _
      $region60: #{tpu_custom_call.1} parent=11 // pred_fallthru
        _
      // Predicated region
      $region61: #{tpu_custom_call.1} parent=11 // pred_check
        %p555 = pneg %p352
      $region62: #{tpu_custom_call.1} parent=11 // pred_check_branch
        %557 = sbr.rel (%p555) target = $region64
      $region63: #{tpu_custom_call.1} parent=11 // pred_region
        _
      $region64: #{tpu_custom_call.1} parent=11 // pred_fallthru
        _
      // Predicated region
      $region65: #{tpu_custom_call.1} parent=11 // pred_check
        %p558 = pneg %p373
      $region66: #{tpu_custom_call.1} parent=11 // pred_check_branch
        %560 = sbr.rel (%p558) target = $region68
      $region67: #{tpu_custom_call.1} parent=11 // pred_region
        _
      $region68: #{tpu_custom_call.1} parent=11 // pred_fallthru
        _
      // Predicated region
      $region69: #{tpu_custom_call.1} parent=11 // pred_check
        %p561 = pneg %p394
      $region70: #{tpu_custom_call.1} parent=11 // pred_check_branch
        %563 = sbr.rel (%p561) target = $region72
      $region71: #{tpu_custom_call.1} parent=11 // pred_region
        _
      $region72: #{tpu_custom_call.1} parent=11 // pred_fallthru
        _
      // Predicated region
      $region73: #{tpu_custom_call.1} parent=11 // pred_check
        %p564 = pneg %p415
      $region74: #{tpu_custom_call.1} parent=11 // pred_check_branch
        %566 = sbr.rel (%p564) target = $region76
      $region75: #{tpu_custom_call.1} parent=11 // pred_region
        _
      $region76: #{tpu_custom_call.1} parent=11 // pred_fallthru
        _
      // Predicated region
      $region77: #{tpu_custom_call.1} parent=11 // pred_check
        %p567 = pneg %p436
      $region78: #{tpu_custom_call.1} parent=11 // pred_check_branch
        %569 = sbr.rel (%p567) target = $region80
      $region79: #{tpu_custom_call.1} parent=11 // pred_region
        _
      $region80: #{tpu_custom_call.1} parent=11 // pred_fallthru
        _
      // Predicated region
      $region81: #{tpu_custom_call.1} parent=11 // pred_check
        %p570 = pneg %p457
      $region82: #{tpu_custom_call.1} parent=11 // pred_check_branch
        %572 = sbr.rel (%p570) target = $region84
      $region83: #{tpu_custom_call.1} parent=11 // pred_region
        _
      $region84: #{tpu_custom_call.1} parent=11 // pred_fallthru
        _
      // Predicated region
      $region85: #{tpu_custom_call.1} parent=11 // pred_check
        %p573 = pneg %p478
      $region86: #{tpu_custom_call.1} parent=11 // pred_check_branch
        %575 = sbr.rel (%p573) target = $region88
      $region87: #{tpu_custom_call.1} parent=11 // pred_region
        _
      $region88: #{tpu_custom_call.1} parent=11 // pred_fallthru
        _
    $region12: #{tpu_custom_call.1} parent=5 // pred_fallthru
      _
    %p576 = scmp.lt.s32.totalorder %s27, 2
    // Predicated region
    $region89: #{tpu_custom_call.1} parent=5 // pred_check
      %p577 = pneg %p576
    $region90: #{tpu_custom_call.1} parent=5 // pred_check_branch
      %579 = sbr.rel (%p577) target = $region92
    $region91: #{tpu_custom_call.1} parent=5 // pred_region
      // Predicated region
      $region93: #{tpu_custom_call.1} parent=91 // pred_check
        %p580 = pneg %p47
      $region94: #{tpu_custom_call.1} parent=91 // pred_check_branch
        %582 = sbr.rel (%p580) target = $region96
      $region95: #{tpu_custom_call.1} parent=91 // pred_region
        %s583 = smul.u32 16, %s27
        %p584 = scmp.lt.s32.totalorder %s583, 31
        %s585 = scalar_select %p584, %s583, 31
        %s586 = smul.addr %s585, 4
        %s587 = scalar_lea.vmem %s0, %s586
        %s588 = smul.u32 16, %s27
      $region96: #{tpu_custom_call.1} parent=91 // pred_fallthru
        _
      // Predicated region
      $region97: #{tpu_custom_call.1} parent=91 // pred_check
        %p589 = pneg %p73
      $region98: #{tpu_custom_call.1} parent=91 // pred_check_branch
        %591 = sbr.rel (%p589) target = $region100
      $region99: #{tpu_custom_call.1} parent=91 // pred_region
        %s592 = smul.u32 16, %s27
        %p593 = scmp.lt.s32.totalorder %s592, 31
        %s594 = scalar_select %p593, %s592, 31
        %s595 = smul.addr %s594, 4
        %s596 = scalar_lea.vmem %s1, %s595
        %s597 = smul.u32 16, %s27
      $region100: #{tpu_custom_call.1} parent=91 // pred_fallthru
        _
    $region92: #{tpu_custom_call.1} parent=5 // pred_fallthru
      _
    %p598 = scmp.le.s32.totalorder 1, %s27
    %p599 = scmp.lt.s32.totalorder %s27, 3
    %p600 = pnand %p598, %p599
    %p601 = pneg %p600
    // Predicated region
    $region101: #{tpu_custom_call.1} parent=5 // pred_check
      _
    $region102: #{tpu_custom_call.1} parent=5 // pred_check_branch
      %603 = sbr.rel (%p600) target = $region104
    $region103: #{tpu_custom_call.1} parent=5 // pred_region
      %s604 = ssub.s32 %s27, 1
      %s605 = smul.u32 16, %s32
      %p606 = scmp.lt.s32.totalorder %s605, 31
      %s607 = scalar_select %p606, %s605, 31
      %s608 = smul.addr %s607, 4
      %s609 = scalar_lea.vmem %s0, %s608
      %p610 = pneg %p53
      %p611 = pneg %p50
      %s612 = smul.u32 16, %s32
      %p613 = scmp.lt.s32.totalorder %s612, 31
      %s614 = scalar_select %p613, %s612, 31
      %s615 = smul.addr %s614, 4
      %s616 = scalar_lea.vmem %s1, %s615
      %p617 = pneg %p79
      %p618 = pneg %p76
      %p619 = pneg %p100
      %p620 = pneg %p97
      %p621 = pneg %p121
      %p622 = pneg %p118
      %p623 = pneg %p142
      %p624 = pneg %p139
      %p625 = pneg %p163
      %p626 = pneg %p160
      %p627 = pneg %p184
      %p628 = pneg %p181
      %p629 = pneg %p205
      %p630 = pneg %p202
      %p631 = pneg %p226
      %p632 = pneg %p223
      %p633 = pneg %p247
      %p634 = pneg %p244
      %p635 = pneg %p268
      %p636 = pneg %p265
      %p637 = pneg %p289
      %p638 = pneg %p286
      %p639 = pneg %p310
      %p640 = pneg %p307
      %p641 = pneg %p331
      %p642 = pneg %p328
      %p643 = pneg %p352
      %p644 = pneg %p349
      %p645 = pneg %p373
      %p646 = pneg %p370
      %p647 = pneg %p394
      %p648 = pneg %p391
      %p649 = pneg %p415
      %p650 = pneg %p412
      %p651 = pneg %p436
      %p652 = pneg %p433
      %p653 = pneg %p457
      %p654 = pneg %p454
      %p655 = pneg %p478
      %p656 = pneg %p475
      %p657 = pneg %p504
      %p658 = pneg %p501
      %s659 = smul.u32 16, %s32
      %p660 = scmp.lt.s32.totalorder %s659, 31
      %s661 = scalar_select %p660, %s659, 31
      %s662 = smul.addr %s661, 8
      %s663 = scalar_lea.vmem %s21, %s662
      %s664 = smul.u32 16, %s32
      %p665 = scmp.lt.s32.totalorder %s664, 31
      %s666 = scalar_select %p665, %s664, 31
      %s667 = smul.addr %s666, 4
      %s668 = scalar_lea.vmem %s0, %s667
      %s669 = smul.u32 16, %s32
      %s670 = smul.u32 16, %s32
      %p671 = scmp.lt.s32.totalorder %s670, 31
      %s672 = scalar_select %p671, %s670, 31
      %s673 = smul.addr %s672, 4
      %s674 = scalar_lea.vmem %s1, %s673
      %s675 = smul.u32 16, %s32
      %s676 = smul.u32 16, %s32
      %p677 = scmp.lt.s32.totalorder %s676, 31
      %s678 = scalar_select %p677, %s676, 31
      %s679 = smul.addr %s678, 8
      %s680 = scalar_lea.vmem %s21, %s679
      %s681 = smul.u32 16, %s32
      %v683 = vld [vmem:[%s668] sm:$0xf]
      %v684 = vld [vmem:[%s668 + $0x4] sm:$0xf]
      %v685 = vld [vmem:[%s668 + $0x8] sm:$0xf]
      %v686 = vld [vmem:[%s668 + $0xc] sm:$0xf]
      %v687 = vld [vmem:[%s668 + $0x10] sm:$0xf]
      %v688 = vld [vmem:[%s668 + $0x14] sm:$0xf]
      %v689 = vld [vmem:[%s668 + $0x18] sm:$0xf]
      %v690 = vld [vmem:[%s668 + $0x1c] sm:$0xf]
      %v691 = vld [vmem:[%s668 + $0x20] sm:$0xf]
      %v692 = vld [vmem:[%s668 + $0x24] sm:$0xf]
      %v693 = vld [vmem:[%s668 + $0x28] sm:$0xf]
      %v694 = vld [vmem:[%s668 + $0x2c] sm:$0xf]
      %v695 = vld [vmem:[%s668 + $0x30] sm:$0xf]
      %v696 = vld [vmem:[%s668 + $0x34] sm:$0xf]
      %v697 = vld [vmem:[%s668 + $0x38] sm:$0xf]
      %v698 = vld [vmem:[%s668 + $0x3c] sm:$0xf]
      %v699 = vld [vmem:[%s2] sm:$0xf]
      %v700 = vld [vmem:[%s3] sm:$0x1]
      %v702 = vlaneseq
      %v703 = vshrl.u32 %v702, 7
      %v704 = vsub.s32 0, %v703
      %v705 = vrot.slane %v700, %v704
      %v723 = vunpack.c.l.b16 %v683
      %v724 = vunpack.c.l.b16 %v684
      %v725 = vunpack.c.l.b16 %v685
      %v726 = vunpack.c.l.b16 %v686
      %v727 = vunpack.c.l.b16 %v687
      %v728 = vunpack.c.l.b16 %v688
      %v729 = vunpack.c.l.b16 %v689
      %v730 = vunpack.c.l.b16 %v690
      %v731 = vunpack.c.l.b16 %v691
      %v732 = vunpack.c.l.b16 %v692
      %v733 = vunpack.c.l.b16 %v693
      %v734 = vunpack.c.l.b16 %v694
      %v735 = vunpack.c.l.b16 %v695
      %v736 = vunpack.c.l.b16 %v696
      %v737 = vunpack.c.l.b16 %v697
      %v738 = vunpack.c.l.b16 %v698
      %v739 = vpack.c.b16 %v724, %v723
      %v740 = vpack.c.b16 %v726, %v725
      %v741 = vpack.c.b16 %v728, %v727
      %v742 = vpack.c.b16 %v730, %v729
      %v743 = vpack.c.b16 %v732, %v731
      %v744 = vpack.c.b16 %v734, %v733
      %v745 = vpack.c.b16 %v736, %v735
      %v746 = vpack.c.b16 %v738, %v737
      %vm747 = vcmask 64512
      %v749 = vsel %vm747, %v739, 0
      %v752 = vsel %vm747, %v740, 0
      %v755 = vsel %vm747, %v741, 0
      %v758 = vsel %vm747, %v742, 0
      %v761 = vsel %vm747, %v743, 0
      %v764 = vsel %vm747, %v744, 0
      %v767 = vsel %vm747, %v745, 0
      %v770 = vsel %vm747, %v746, 0
      %vm772 = vcmask 1043456
      %v774 = vsel %vm772, %v699, 0
      %776 = vmatprep.subr.bf16.mxu0 0
      %777 = vmatpush1.bf16.msra.mxu0 %v774
      %778 = vmatprep.subr.bf16.mxu0 0
      %779 = vmatpush1.bf16.msra.mxu0 0
      %780 = vmatprep.subr.bf16.mxu0 0
      %781 = vmatpush1.bf16.msra.mxu0 0
      %782 = vmatprep.subr.bf16.mxu0 0
      %783 = vmatpush1.bf16.msra.mxu0 0
      %784 = vmatprep.subr.bf16.mxu0 0
      %785 = vmatpush1.bf16.msra.mxu0 0
      %786 = vmatprep.subr.bf16.mxu0 0
      %787 = vmatpush1.bf16.msra.mxu0 0
      %788 = vmatprep.subr.bf16.mxu0 0
      %789 = vmatpush1.bf16.msra.mxu0 0
      %790 = vmatprep.subr.bf16.mxu0 0
      %791 = vmatpush1.bf16.msra.mxu0 0
      %792 = vmatprep.subr.bf16.mxu0 0
      %793 = vmatpush1.bf16.msra.mxu0 0
      %794 = vmatprep.subr.bf16.mxu0 0
      %795 = vmatpush1.bf16.msra.mxu0 0
      %796 = vmatprep.subr.bf16.mxu0 0
      %797 = vmatpush1.bf16.msra.mxu0 0
      %798 = vmatprep.subr.bf16.mxu0 0
      %799 = vmatpush1.bf16.msra.mxu0 0
      %800 = vmatprep.subr.bf16.mxu0 0
      %801 = vmatpush1.bf16.msra.mxu0 0
      %802 = vmatprep.subr.bf16.mxu0 0
      %803 = vmatpush1.bf16.msra.mxu0 0
      %804 = vmatprep.subr.bf16.mxu0 0
      %805 = vmatpush1.bf16.msra.mxu0 0
      %806 = vmatprep.subr.bf16.mxu0 0
      %807 = vmatpush1.bf16.msra.mxu0 0
      %808 = vmatprep.mubr.bf16.mxu0 0
      %809 = vmatmul.mubr.bf16.gmra.mrb[0].mxu0 %v749
      %v810 = vpop.f32.mrb[0].mxu0
      %v811 = vadd.f32 %v705, %v810
      %v812 = vpop.f32.mrb[0].mxu0
      %v813 = vpop.f32.mrb[0].mxu0
      %v814 = vadd.f32 %v705, %v813
      %v815 = vpop.f32.mrb[0].mxu0
      %816 = vmatprep.mubr.bf16.mxu0 0
      %817 = vmatmul.mubr.bf16.gmra.mrb[0].mxu0 %v752
      %v818 = vpop.f32.mrb[0].mxu0
      %v819 = vadd.f32 %v705, %v818
      %v820 = vpop.f32.mrb[0].mxu0
      %v821 = vpop.f32.mrb[0].mxu0
      %v822 = vadd.f32 %v705, %v821
      %v823 = vpop.f32.mrb[0].mxu0
      %824 = vmatprep.mubr.bf16.mxu0 0
      %825 = vmatmul.mubr.bf16.gmra.mrb[0].mxu0 %v755
      %v826 = vpop.f32.mrb[0].mxu0
      %v827 = vadd.f32 %v705, %v826
      %v828 = vpop.f32.mrb[0].mxu0
      %v829 = vpop.f32.mrb[0].mxu0
      %v830 = vadd.f32 %v705, %v829
      %v831 = vpop.f32.mrb[0].mxu0
      %832 = vmatprep.mubr.bf16.mxu0 0
      %833 = vmatmul.mubr.bf16.gmra.mrb[0].mxu0 %v758
      %v834 = vpop.f32.mrb[0].mxu0
      %v835 = vadd.f32 %v705, %v834
      %v836 = vpop.f32.mrb[0].mxu0
      %v837 = vpop.f32.mrb[0].mxu0
      %v838 = vadd.f32 %v705, %v837
      %v839 = vpop.f32.mrb[0].mxu0
      %840 = vmatprep.mubr.bf16.mxu0 0
      %841 = vmatmul.mubr.bf16.gmra.mrb[0].mxu0 %v761
      %v842 = vpop.f32.mrb[0].mxu0
      %v843 = vadd.f32 %v705, %v842
      %v844 = vpop.f32.mrb[0].mxu0
      %v845 = vpop.f32.mrb[0].mxu0
      %v846 = vadd.f32 %v705, %v845
      %v847 = vpop.f32.mrb[0].mxu0
      %848 = vmatprep.mubr.bf16.mxu0 0
      %849 = vmatmul.mubr.bf16.gmra.mrb[0].mxu0 %v764
      %v850 = vpop.f32.mrb[0].mxu0
      %v851 = vadd.f32 %v705, %v850
      %v852 = vpop.f32.mrb[0].mxu0
      %v853 = vpop.f32.mrb[0].mxu0
      %v854 = vadd.f32 %v705, %v853
      %v855 = vpop.f32.mrb[0].mxu0
      %856 = vmatprep.mubr.bf16.mxu0 0
      %857 = vmatmul.mubr.bf16.gmra.mrb[0].mxu0 %v767
      %v858 = vpop.f32.mrb[0].mxu0
      %v859 = vadd.f32 %v705, %v858
      %v860 = vpop.f32.mrb[0].mxu0
      %v861 = vpop.f32.mrb[0].mxu0
      %v862 = vadd.f32 %v705, %v861
      %v863 = vpop.f32.mrb[0].mxu0
      %864 = vmatprep.mubr.bf16.mxu0 0
      %865 = vmatmul.mubr.bf16.gmra.mrb[0].mxu0 %v770
      %v866 = vpop.f32.mrb[0].mxu0
      %v867 = vadd.f32 %v705, %v866
      %v868 = vpop.f32.mrb[0].mxu0
      %v869 = vpop.f32.mrb[0].mxu0
      %v870 = vadd.f32 %v705, %v869
      %v871 = vpop.f32.mrb[0].mxu0
      %872 = vdwg.mxu0
      %v873 = vmax.f32 %v811, 0.0
      %v874 = vmax.f32 %v814, 0.0
      %v875 = vmax.f32 %v819, 0.0
      %v876 = vmax.f32 %v822, 0.0
      %v877 = vmax.f32 %v827, 0.0
      %v878 = vmax.f32 %v830, 0.0
      %v879 = vmax.f32 %v835, 0.0
      %v880 = vmax.f32 %v838, 0.0
      %v881 = vmax.f32 %v843, 0.0
      %v882 = vmax.f32 %v846, 0.0
      %v883 = vmax.f32 %v851, 0.0
      %v884 = vmax.f32 %v854, 0.0
      %v885 = vmax.f32 %v859, 0.0
      %v886 = vmax.f32 %v862, 0.0
      %v887 = vmax.f32 %v867, 0.0
      %v888 = vmax.f32 %v870, 0.0
      %v889 = vld [vmem:[%s4] sm:$0xf]
      %v890 = vld [vmem:[%s4 + $0x4] sm:$0xf]
      %v891 = vld [vmem:[%s4 + $0x8] sm:$0xf]
      %v892 = vld [vmem:[%s4 + $0xc] sm:$0xf]
      %v893 = vld [vmem:[%s4 + $0x10] sm:$0xf]
      %v894 = vld [vmem:[%s4 + $0x14] sm:$0xf]
      %v895 = vld [vmem:[%s4 + $0x18] sm:$0xf]
      %v896 = vld [vmem:[%s4 + $0x1c] sm:$0xf]
      %v897 = vld [vmem:[%s5] sm:$0x1]
      %v898 = vpack.c.bf16 %v874, %v873
      %v899 = vpack.c.bf16 %v876, %v875
      %v900 = vpack.c.bf16 %v878, %v877
      %v901 = vpack.c.bf16 %v880, %v879
      %v902 = vpack.c.bf16 %v882, %v881
      %v903 = vpack.c.bf16 %v884, %v883
      %v904 = vpack.c.bf16 %v886, %v885
      %v905 = vpack.c.bf16 %v888, %v887
      %v907 = vlaneseq
      %v908 = vshrl.u32 %v907, 7
      %v909 = vsub.s32 0, %v908
      %v910 = vrot.slane %v897, %v909
      %v920 = vunpack.c.l.b16 %v889
      %v921 = vunpack.c.l.b16 %v890
      %v922 = vunpack.c.l.b16 %v891
      %v923 = vunpack.c.l.b16 %v892
      %v924 = vunpack.c.l.b16 %v893
      %v925 = vunpack.c.l.b16 %v894
      %v926 = vunpack.c.l.b16 %v895
      %v927 = vunpack.c.l.b16 %v896
      %v928 = vpack.c.b16 %v921, %v920
      %v929 = vpack.c.b16 %v923, %v922
      %v930 = vpack.c.b16 %v925, %v924
      %v931 = vpack.c.b16 %v927, %v926
      %vm936 = vcmask 523264
      %v938 = vsel %vm936, %v898, 0
      %v941 = vsel %vm936, %v899, 0
      %v944 = vsel %vm936, %v900, 0
      %v947 = vsel %vm936, %v901, 0
      %v950 = vsel %vm936, %v902, 0
      %v953 = vsel %vm936, %v903, 0
      %v956 = vsel %vm936, %v904, 0
      %v959 = vsel %vm936, %v905, 0
      %961 = vmatprep.subr.bf16.mxu0 0
      %962 = vmatpush1.bf16.msra.mxu0 %v928
      %963 = vmatprep.subr.bf16.mxu0 0
      %964 = vmatpush1.bf16.msra.mxu0 %v929
      %965 = vmatprep.subr.bf16.mxu0 0
      %966 = vmatpush1.bf16.msra.mxu0 %v930
      %967 = vmatprep.subr.bf16.mxu0 0
      %968 = vmatpush1.bf16.msra.mxu0 %v931
      %969 = vmatprep.subr.bf16.mxu0 0
      %970 = vmatpush1.bf16.msra.mxu0 0
      %971 = vmatprep.subr.bf16.mxu0 0
      %972 = vmatpush1.bf16.msra.mxu0 0
      %973 = vmatprep.subr.bf16.mxu0 0
      %974 = vmatpush1.bf16.msra.mxu0 0
      %975 = vmatprep.subr.bf16.mxu0 0
      %976 = vmatpush1.bf16.msra.mxu0 0
      %977 = vmatprep.subr.bf16.mxu0 0
      %978 = vmatpush1.bf16.msra.mxu0 0
      %979 = vmatprep.subr.bf16.mxu0 0
      %980 = vmatpush1.bf16.msra.mxu0 0
      %981 = vmatprep.subr.bf16.mxu0 0
      %982 = vmatpush1.bf16.msra.mxu0 0
      %983 = vmatprep.subr.bf16.mxu0 0
      %984 = vmatpush1.bf16.msra.mxu0 0
      %985 = vmatprep.subr.bf16.mxu0 0
      %986 = vmatpush1.bf16.msra.mxu0 0
      %987 = vmatprep.subr.bf16.mxu0 0
      %988 = vmatpush1.bf16.msra.mxu0 0
      %989 = vmatprep.subr.bf16.mxu0 0
      %990 = vmatpush1.bf16.msra.mxu0 0
      %991 = vmatprep.subr.bf16.mxu0 0
      %992 = vmatpush1.bf16.msra.mxu0 0
      %993 = vmatprep.mubr.bf16.mxu0 0
      %994 = vmatmul.mubr.bf16.gmra.mrb[0].mxu0 %v938
      %v995 = vpop.f32.mrb[0].mxu0
      %v996 = vadd.f32 %v910, %v995
      %v997 = vpop.f32.mrb[0].mxu0
      %v998 = vpop.f32.mrb[0].mxu0
      %v999 = vadd.f32 %v910, %v998
      %v1000 = vpop.f32.mrb[0].mxu0
      %1001 = vmatprep.mubr.bf16.mxu0 0
      %1002 = vmatmul.mubr.bf16.gmra.mrb[0].mxu0 %v941
      %v1003 = vpop.f32.mrb[0].mxu0
      %v1004 = vadd.f32 %v910, %v1003
      %v1005 = vpop.f32.mrb[0].mxu0
      %v1006 = vpop.f32.mrb[0].mxu0
      %v1007 = vadd.f32 %v910, %v1006
      %v1008 = vpop.f32.mrb[0].mxu0
      %1009 = vmatprep.mubr.bf16.mxu0 0
      %1010 = vmatmul.mubr.bf16.gmra.mrb[0].mxu0 %v944
      %v1011 = vpop.f32.mrb[0].mxu0
      %v1012 = vadd.f32 %v910, %v1011
      %v1013 = vpop.f32.mrb[0].mxu0
      %v1014 = vpop.f32.mrb[0].mxu0
      %v1015 = vadd.f32 %v910, %v1014
      %v1016 = vpop.f32.mrb[0].mxu0
      %1017 = vmatprep.mubr.bf16.mxu0 0
      %1018 = vmatmul.mubr.bf16.gmra.mrb[0].mxu0 %v947
      %v1019 = vpop.f32.mrb[0].mxu0
      %v1020 = vadd.f32 %v910, %v1019
      %v1021 = vpop.f32.mrb[0].mxu0
      %v1022 = vpop.f32.mrb[0].mxu0
      %v1023 = vadd.f32 %v910, %v1022
      %v1024 = vpop.f32.mrb[0].mxu0
      %1025 = vmatprep.mubr.bf16.mxu0 0
      %1026 = vmatmul.mubr.bf16.gmra.mrb[0].mxu0 %v950
      %v1027 = vpop.f32.mrb[0].mxu0
      %v1028 = vadd.f32 %v910, %v1027
      %v1029 = vpop.f32.mrb[0].mxu0
      %v1030 = vpop.f32.mrb[0].mxu0
      %v1031 = vadd.f32 %v910, %v1030
      %v1032 = vpop.f32.mrb[0].mxu0
      %1033 = vmatprep.mubr.bf16.mxu0 0
      %1034 = vmatmul.mubr.bf16.gmra.mrb[0].mxu0 %v953
      %v1035 = vpop.f32.mrb[0].mxu0
      %v1036 = vadd.f32 %v910, %v1035
      %v1037 = vpop.f32.mrb[0].mxu0
      %v1038 = vpop.f32.mrb[0].mxu0
      %v1039 = vadd.f32 %v910, %v1038
      %v1040 = vpop.f32.mrb[0].mxu0
      %1041 = vmatprep.mubr.bf16.mxu0 0
      %1042 = vmatmul.mubr.bf16.gmra.mrb[0].mxu0 %v956
      %v1043 = vpop.f32.mrb[0].mxu0
      %v1044 = vadd.f32 %v910, %v1043
      %v1045 = vpop.f32.mrb[0].mxu0
      %v1046 = vpop.f32.mrb[0].mxu0
      %v1047 = vadd.f32 %v910, %v1046
      %v1048 = vpop.f32.mrb[0].mxu0
      %1049 = vmatprep.mubr.bf16.mxu0 0
      %1050 = vmatmul.mubr.bf16.gmra.mrb[0].mxu0 %v959
      %v1051 = vpop.f32.mrb[0].mxu0
      %v1052 = vadd.f32 %v910, %v1051
      %v1053 = vpop.f32.mrb[0].mxu0
      %v1054 = vpop.f32.mrb[0].mxu0
      %v1055 = vadd.f32 %v910, %v1054
      %v1056 = vpop.f32.mrb[0].mxu0
      %1057 = vdwg.mxu0
      %v1058 = vmax.f32 %v996, 0.0
      %v1059 = vmax.f32 %v999, 0.0
      %v1060 = vmax.f32 %v1004, 0.0
      %v1061 = vmax.f32 %v1007, 0.0
      %v1062 = vmax.f32 %v1012, 0.0
      %v1063 = vmax.f32 %v1015, 0.0
      %v1064 = vmax.f32 %v1020, 0.0
      %v1065 = vmax.f32 %v1023, 0.0
      %v1066 = vmax.f32 %v1028, 0.0
      %v1067 = vmax.f32 %v1031, 0.0
      %v1068 = vmax.f32 %v1036, 0.0
      %v1069 = vmax.f32 %v1039, 0.0
      %v1070 = vmax.f32 %v1044, 0.0
      %v1071 = vmax.f32 %v1047, 0.0
      %v1072 = vmax.f32 %v1052, 0.0
      %v1073 = vmax.f32 %v1055, 0.0
      %v1074 = vld [vmem:[%s6] sm:$0xf]
      %v1075 = vld [vmem:[%s6 + $0x4] sm:$0xf]
      %v1076 = vld [vmem:[%s6 + $0x8] sm:$0xf]
      %v1077 = vld [vmem:[%s6 + $0xc] sm:$0xf]
      %v1078 = vld [vmem:[%s6 + $0x10] sm:$0xf]
      %v1079 = vld [vmem:[%s6 + $0x14] sm:$0xf]
      %v1080 = vld [vmem:[%s6 + $0x18] sm:$0xf]
      %v1081 = vld [vmem:[%s6 + $0x1c] sm:$0xf]
      %v1082 = vld [vmem:[%s7] sm:$0x1]
      %v1083 = vpack.c.bf16 %v1059, %v1058
      %v1084 = vpack.c.bf16 %v1061, %v1060
      %v1085 = vpack.c.bf16 %v1063, %v1062
      %v1086 = vpack.c.bf16 %v1065, %v1064
      %v1087 = vpack.c.bf16 %v1067, %v1066
      %v1088 = vpack.c.bf16 %v1069, %v1068
      %v1089 = vpack.c.bf16 %v1071, %v1070
      %v1090 = vpack.c.bf16 %v1073, %v1072
      %v1092 = vlaneseq
      %v1093 = vshrl.u32 %v1092, 7
      %v1094 = vsub.s32 0, %v1093
      %v1095 = vrot.slane %v1082, %v1094
      %v1105 = vunpack.c.l.b16 %v1074
      %v1106 = vunpack.c.l.b16 %v1075
      %v1107 = vunpack.c.l.b16 %v1076
      %v1108 = vunpack.c.l.b16 %v1077
      %v1109 = vunpack.c.l.b16 %v1078
      %v1110 = vunpack.c.l.b16 %v1079
      %v1111 = vunpack.c.l.b16 %v1080
      %v1112 = vunpack.c.l.b16 %v1081
      %v1113 = vpack.c.b16 %v1106, %v1105
      %v1114 = vpack.c.b16 %v1108, %v1107
      %v1115 = vpack.c.b16 %v1110, %v1109
      %v1116 = vpack.c.b16 %v1112, %v1111
      %v1122 = vsel %vm936, %v1083, 0
      %v1125 = vsel %vm936, %v1084, 0
      %v1128 = vsel %vm936, %v1085, 0
      %v1131 = vsel %vm936, %v1086, 0
      %v1134 = vsel %vm936, %v1087, 0
      %v1137 = vsel %vm936, %v1088, 0
      %v1140 = vsel %vm936, %v1089, 0
      %v1143 = vsel %vm936, %v1090, 0
      %1145 = vmatprep.subr.bf16.mxu0 0
      %1146 = vmatpush1.bf16.msra.mxu0 %v1113
      %1147 = vmatprep.subr.bf16.mxu0 0
      %1148 = vmatpush1.bf16.msra.mxu0 %v1114
      %1149 = vmatprep.subr.bf16.mxu0 0
      %1150 = vmatpush1.bf16.msra.mxu0 %v1115
      %1151 = vmatprep.subr.bf16.mxu0 0
      %1152 = vmatpush1.bf16.msra.mxu0 %v1116
      %1153 = vmatprep.subr.bf16.mxu0 0
      %1154 = vmatpush1.bf16.msra.mxu0 0
      %1155 = vmatprep.subr.bf16.mxu0 0
      %1156 = vmatpush1.bf16.msra.mxu0 0
      %1157 = vmatprep.subr.bf16.mxu0 0
      %1158 = vmatpush1.bf16.msra.mxu0 0
      %1159 = vmatprep.subr.bf16.mxu0 0
      %1160 = vmatpush1.bf16.msra.mxu0 0
      %1161 = vmatprep.subr.bf16.mxu0 0
      %1162 = vmatpush1.bf16.msra.mxu0 0
      %1163 = vmatprep.subr.bf16.mxu0 0
      %1164 = vmatpush1.bf16.msra.mxu0 0
      %1165 = vmatprep.subr.bf16.mxu0 0
      %1166 = vmatpush1.bf16.msra.mxu0 0
      %1167 = vmatprep.subr.bf16.mxu0 0
      %1168 = vmatpush1.bf16.msra.mxu0 0
      %1169 = vmatprep.subr.bf16.mxu0 0
      %1170 = vmatpush1.bf16.msra.mxu0 0
      %1171 = vmatprep.subr.bf16.mxu0 0
      %1172 = vmatpush1.bf16.msra.mxu0 0
      %1173 = vmatprep.subr.bf16.mxu0 0
      %1174 = vmatpush1.bf16.msra.mxu0 0
      %1175 = vmatprep.subr.bf16.mxu0 0
      %1176 = vmatpush1.bf16.msra.mxu0 0
      %1177 = vmatprep.mubr.bf16.mxu0 0
      %1178 = vmatmul.mubr.bf16.gmra.mrb[0].mxu0 %v1122
      %v1179 = vpop.f32.mrb[0].mxu0
      %v1180 = vadd.f32 %v1095, %v1179
      %v1181 = vpop.f32.mrb[0].mxu0
      %v1182 = vpop.f32.mrb[0].mxu0
      %v1183 = vadd.f32 %v1095, %v1182
      %v1184 = vpop.f32.mrb[0].mxu0
      %1185 = vmatprep.mubr.bf16.mxu0 0
      %1186 = vmatmul.mubr.bf16.gmra.mrb[0].mxu0 %v1125
      %v1187 = vpop.f32.mrb[0].mxu0
      %v1188 = vadd.f32 %v1095, %v1187
      %v1189 = vpop.f32.mrb[0].mxu0
      %v1190 = vpop.f32.mrb[0].mxu0
      %v1191 = vadd.f32 %v1095, %v1190
      %v1192 = vpop.f32.mrb[0].mxu0
      %1193 = vmatprep.mubr.bf16.mxu0 0
      %1194 = vmatmul.mubr.bf16.gmra.mrb[0].mxu0 %v1128
      %v1195 = vpop.f32.mrb[0].mxu0
      %v1196 = vadd.f32 %v1095, %v1195
      %v1197 = vpop.f32.mrb[0].mxu0
      %v1198 = vpop.f32.mrb[0].mxu0
      %v1199 = vadd.f32 %v1095, %v1198
      %v1200 = vpop.f32.mrb[0].mxu0
      %1201 = vmatprep.mubr.bf16.mxu0 0
      %1202 = vmatmul.mubr.bf16.gmra.mrb[0].mxu0 %v1131
      %v1203 = vpop.f32.mrb[0].mxu0
      %v1204 = vadd.f32 %v1095, %v1203
      %v1205 = vpop.f32.mrb[0].mxu0
      %v1206 = vpop.f32.mrb[0].mxu0
      %v1207 = vadd.f32 %v1095, %v1206
      %v1208 = vpop.f32.mrb[0].mxu0
      %1209 = vmatprep.mubr.bf16.mxu0 0
      %1210 = vmatmul.mubr.bf16.gmra.mrb[0].mxu0 %v1134
      %v1211 = vpop.f32.mrb[0].mxu0
      %v1212 = vadd.f32 %v1095, %v1211
      %v1213 = vpop.f32.mrb[0].mxu0
      %v1214 = vpop.f32.mrb[0].mxu0
      %v1215 = vadd.f32 %v1095, %v1214
      %v1216 = vpop.f32.mrb[0].mxu0
      %1217 = vmatprep.mubr.bf16.mxu0 0
      %1218 = vmatmul.mubr.bf16.gmra.mrb[0].mxu0 %v1137
      %v1219 = vpop.f32.mrb[0].mxu0
      %v1220 = vadd.f32 %v1095, %v1219
      %v1221 = vpop.f32.mrb[0].mxu0
      %v1222 = vpop.f32.mrb[0].mxu0
      %v1223 = vadd.f32 %v1095, %v1222
      %v1224 = vpop.f32.mrb[0].mxu0
      %1225 = vmatprep.mubr.bf16.mxu0 0
      %1226 = vmatmul.mubr.bf16.gmra.mrb[0].mxu0 %v1140
      %v1227 = vpop.f32.mrb[0].mxu0
      %v1228 = vadd.f32 %v1095, %v1227
      %v1229 = vpop.f32.mrb[0].mxu0
      %v1230 = vpop.f32.mrb[0].mxu0
      %v1231 = vadd.f32 %v1095, %v1230
      %v1232 = vpop.f32.mrb[0].mxu0
      %1233 = vmatprep.mubr.bf16.mxu0 0
      %1234 = vmatmul.mubr.bf16.gmra.mrb[0].mxu0 %v1143
      %v1235 = vpop.f32.mrb[0].mxu0
      %v1236 = vadd.f32 %v1095, %v1235
      %v1237 = vpop.f32.mrb[0].mxu0
      %v1238 = vpop.f32.mrb[0].mxu0
      %v1239 = vadd.f32 %v1095, %v1238
      %v1240 = vpop.f32.mrb[0].mxu0
      %1241 = vdwg.mxu0
      %v1242 = vmax.f32 %v1180, 0.0
      %v1243 = vmax.f32 %v1183, 0.0
      %v1244 = vmax.f32 %v1188, 0.0
      %v1245 = vmax.f32 %v1191, 0.0
      %v1246 = vmax.f32 %v1196, 0.0
      %v1247 = vmax.f32 %v1199, 0.0
      %v1248 = vmax.f32 %v1204, 0.0
      %v1249 = vmax.f32 %v1207, 0.0
      %v1250 = vmax.f32 %v1212, 0.0
      %v1251 = vmax.f32 %v1215, 0.0
      %v1252 = vmax.f32 %v1220, 0.0
      %v1253 = vmax.f32 %v1223, 0.0
      %v1254 = vmax.f32 %v1228, 0.0
      %v1255 = vmax.f32 %v1231, 0.0
      %v1256 = vmax.f32 %v1236, 0.0
      %v1257 = vmax.f32 %v1239, 0.0
      %v1258 = vld [vmem:[%s8] sm:$0xf]
      %v1259 = vld [vmem:[%s8 + $0x4] sm:$0xf]
      %v1260 = vld [vmem:[%s8 + $0x8] sm:$0xf]
      %v1261 = vld [vmem:[%s8 + $0xc] sm:$0xf]
      %v1262 = vld [vmem:[%s8 + $0x10] sm:$0xf]
      %v1263 = vld [vmem:[%s8 + $0x14] sm:$0xf]
      %v1264 = vld [vmem:[%s8 + $0x18] sm:$0xf]
      %v1265 = vld [vmem:[%s8 + $0x1c] sm:$0xf]
      %v1266 = vld [vmem:[%s9] sm:$0x1]
      %v1267 = vpack.c.bf16 %v1243, %v1242
      %v1268 = vpack.c.bf16 %v1245, %v1244
      %v1269 = vpack.c.bf16 %v1247, %v1246
      %v1270 = vpack.c.bf16 %v1249, %v1248
      %v1271 = vpack.c.bf16 %v1251, %v1250
      %v1272 = vpack.c.bf16 %v1253, %v1252
      %v1273 = vpack.c.bf16 %v1255, %v1254
      %v1274 = vpack.c.bf16 %v1257, %v1256
      %v1276 = vlaneseq
      %v1277 = vshrl.u32 %v1276, 7
      %v1278 = vsub.s32 0, %v1277
      %v1279 = vrot.slane %v1266, %v1278
      %v1289 = vunpack.c.l.b16 %v1258
      %v1290 = vunpack.c.l.b16 %v1259
      %v1291 = vunpack.c.l.b16 %v1260
      %v1292 = vunpack.c.l.b16 %v1261
      %v1293 = vunpack.c.l.b16 %v1262
      %v1294 = vunpack.c.l.b16 %v1263
      %v1295 = vunpack.c.l.b16 %v1264
      %v1296 = vunpack.c.l.b16 %v1265
      %v1297 = vpack.c.b16 %v1290, %v1289
      %v1298 = vpack.c.b16 %v1292, %v1291
      %v1299 = vpack.c.b16 %v1294, %v1293
      %v1300 = vpack.c.b16 %v1296, %v1295
      %v1306 = vsel %vm936, %v1267, 0
      %v1309 = vsel %vm936, %v1268, 0
      %v1312 = vsel %vm936, %v1269, 0
      %v1315 = vsel %vm936, %v1270, 0
      %v1318 = vsel %vm936, %v1271, 0
      %v1321 = vsel %vm936, %v1272, 0
      %v1324 = vsel %vm936, %v1273, 0
      %v1327 = vsel %vm936, %v1274, 0
      %1329 = vmatprep.subr.bf16.mxu0 0
      %1330 = vmatpush1.bf16.msra.mxu0 %v1297
      %1331 = vmatprep.subr.bf16.mxu0 0
      %1332 = vmatpush1.bf16.msra.mxu0 %v1298
      %1333 = vmatprep.subr.bf16.mxu0 0
      %1334 = vmatpush1.bf16.msra.mxu0 %v1299
      %1335 = vmatprep.subr.bf16.mxu0 0
      %1336 = vmatpush1.bf16.msra.mxu0 %v1300
      %1337 = vmatprep.subr.bf16.mxu0 0
      %1338 = vmatpush1.bf16.msra.mxu0 0
      %1339 = vmatprep.subr.bf16.mxu0 0
      %1340 = vmatpush1.bf16.msra.mxu0 0
      %1341 = vmatprep.subr.bf16.mxu0 0
      %1342 = vmatpush1.bf16.msra.mxu0 0
      %1343 = vmatprep.subr.bf16.mxu0 0
      %1344 = vmatpush1.bf16.msra.mxu0 0
      %1345 = vmatprep.subr.bf16.mxu0 0
      %1346 = vmatpush1.bf16.msra.mxu0 0
      %1347 = vmatprep.subr.bf16.mxu0 0
      %1348 = vmatpush1.bf16.msra.mxu0 0
      %1349 = vmatprep.subr.bf16.mxu0 0
      %1350 = vmatpush1.bf16.msra.mxu0 0
      %1351 = vmatprep.subr.bf16.mxu0 0
      %1352 = vmatpush1.bf16.msra.mxu0 0
      %1353 = vmatprep.subr.bf16.mxu0 0
      %1354 = vmatpush1.bf16.msra.mxu0 0
      %1355 = vmatprep.subr.bf16.mxu0 0
      %1356 = vmatpush1.bf16.msra.mxu0 0
      %1357 = vmatprep.subr.bf16.mxu0 0
      %1358 = vmatpush1.bf16.msra.mxu0 0
      %1359 = vmatprep.subr.bf16.mxu0 0
      %1360 = vmatpush1.bf16.msra.mxu0 0
      %1361 = vmatprep.mubr.bf16.mxu0 0
      %1362 = vmatmul.mubr.bf16.gmra.mrb[0].mxu0 %v1306
      %v1363 = vpop.f32.mrb[0].mxu0
      %v1364 = vadd.f32 %v1279, %v1363
      %v1365 = vpop.f32.mrb[0].mxu0
      %v1366 = vpop.f32.mrb[0].mxu0
      %v1367 = vadd.f32 %v1279, %v1366
      %v1368 = vpop.f32.mrb[0].mxu0
      %1369 = vmatprep.mubr.bf16.mxu0 0
      %1370 = vmatmul.mubr.bf16.gmra.mrb[0].mxu0 %v1309
      %v1371 = vpop.f32.mrb[0].mxu0
      %v1372 = vadd.f32 %v1279, %v1371
      %v1373 = vpop.f32.mrb[0].mxu0
      %v1374 = vpop.f32.mrb[0].mxu0
      %v1375 = vadd.f32 %v1279, %v1374
      %v1376 = vpop.f32.mrb[0].mxu0
      %1377 = vmatprep.mubr.bf16.mxu0 0
      %1378 = vmatmul.mubr.bf16.gmra.mrb[0].mxu0 %v1312
      %v1379 = vpop.f32.mrb[0].mxu0
      %v1380 = vadd.f32 %v1279, %v1379
      %v1381 = vpop.f32.mrb[0].mxu0
      %v1382 = vpop.f32.mrb[0].mxu0
      %v1383 = vadd.f32 %v1279, %v1382
      %v1384 = vpop.f32.mrb[0].mxu0
      %1385 = vmatprep.mubr.bf16.mxu0 0
      %1386 = vmatmul.mubr.bf16.gmra.mrb[0].mxu0 %v1315
      %v1387 = vpop.f32.mrb[0].mxu0
      %v1388 = vadd.f32 %v1279, %v1387
      %v1389 = vpop.f32.mrb[0].mxu0
      %v1390 = vpop.f32.mrb[0].mxu0
      %v1391 = vadd.f32 %v1279, %v1390
      %v1392 = vpop.f32.mrb[0].mxu0
      %1393 = vmatprep.mubr.bf16.mxu0 0
      %1394 = vmatmul.mubr.bf16.gmra.mrb[0].mxu0 %v1318
      %v1395 = vpop.f32.mrb[0].mxu0
      %v1396 = vadd.f32 %v1279, %v1395
      %v1397 = vpop.f32.mrb[0].mxu0
      %v1398 = vpop.f32.mrb[0].mxu0
      %v1399 = vadd.f32 %v1279, %v1398
      %v1400 = vpop.f32.mrb[0].mxu0
      %1401 = vmatprep.mubr.bf16.mxu0 0
      %1402 = vmatmul.mubr.bf16.gmra.mrb[0].mxu0 %v1321
      %v1403 = vpop.f32.mrb[0].mxu0
      %v1404 = vadd.f32 %v1279, %v1403
      %v1405 = vpop.f32.mrb[0].mxu0
      %v1406 = vpop.f32.mrb[0].mxu0
      %v1407 = vadd.f32 %v1279, %v1406
      %v1408 = vpop.f32.mrb[0].mxu0
      %1409 = vmatprep.mubr.bf16.mxu0 0
      %1410 = vmatmul.mubr.bf16.gmra.mrb[0].mxu0 %v1324
      %v1411 = vpop.f32.mrb[0].mxu0
      %v1412 = vadd.f32 %v1279, %v1411
      %v1413 = vpop.f32.mrb[0].mxu0
      %v1414 = vpop.f32.mrb[0].mxu0
      %v1415 = vadd.f32 %v1279, %v1414
      %v1416 = vpop.f32.mrb[0].mxu0
      %1417 = vmatprep.mubr.bf16.mxu0 0
      %1418 = vmatmul.mubr.bf16.gmra.mrb[0].mxu0 %v1327
      %v1419 = vpop.f32.mrb[0].mxu0
      %v1420 = vadd.f32 %v1279, %v1419
      %v1421 = vpop.f32.mrb[0].mxu0
      %v1422 = vpop.f32.mrb[0].mxu0
      %v1423 = vadd.f32 %v1279, %v1422
      %v1424 = vpop.f32.mrb[0].mxu0
      %1425 = vdwg.mxu0
      %v1426 = vmax.f32 %v1364, 0.0
      %v1427 = vmax.f32 %v1367, 0.0
      %v1428 = vmax.f32 %v1372, 0.0
      %v1429 = vmax.f32 %v1375, 0.0
      %v1430 = vmax.f32 %v1380, 0.0
      %v1431 = vmax.f32 %v1383, 0.0
      %v1432 = vmax.f32 %v1388, 0.0
      %v1433 = vmax.f32 %v1391, 0.0
      %v1434 = vmax.f32 %v1396, 0.0
      %v1435 = vmax.f32 %v1399, 0.0
      %v1436 = vmax.f32 %v1404, 0.0
      %v1437 = vmax.f32 %v1407, 0.0
      %v1438 = vmax.f32 %v1412, 0.0
      %v1439 = vmax.f32 %v1415, 0.0
      %v1440 = vmax.f32 %v1420, 0.0
      %v1441 = vmax.f32 %v1423, 0.0
      %v1442 = vld [vmem:[%s10] sm:$0xf]
      %v1443 = vld [vmem:[%s10 + $0x4] sm:$0xf]
      %v1444 = vld [vmem:[%s10 + $0x8] sm:$0xf]
      %v1445 = vld [vmem:[%s10 + $0xc] sm:$0xf]
      %v1446 = vld [vmem:[%s10 + $0x10] sm:$0xf]
      %v1447 = vld [vmem:[%s10 + $0x14] sm:$0xf]
      %v1448 = vld [vmem:[%s10 + $0x18] sm:$0xf]
      %v1449 = vld [vmem:[%s10 + $0x1c] sm:$0xf]
      %v1450 = vld [vmem:[%s11] sm:$0x1]
      %v1451 = vpack.c.bf16 %v1427, %v1426
      %v1452 = vpack.c.bf16 %v1429, %v1428
      %v1453 = vpack.c.bf16 %v1431, %v1430
      %v1454 = vpack.c.bf16 %v1433, %v1432
      %v1455 = vpack.c.bf16 %v1435, %v1434
      %v1456 = vpack.c.bf16 %v1437, %v1436
      %v1457 = vpack.c.bf16 %v1439, %v1438
      %v1458 = vpack.c.bf16 %v1441, %v1440
      %v1460 = vlaneseq
      %v1461 = vshrl.u32 %v1460, 7
      %v1462 = vsub.s32 0, %v1461
      %v1463 = vrot.slane %v1450, %v1462
      %v1473 = vunpack.c.l.b16 %v1442
      %v1474 = vunpack.c.l.b16 %v1443
      %v1475 = vunpack.c.l.b16 %v1444
      %v1476 = vunpack.c.l.b16 %v1445
      %v1477 = vunpack.c.l.b16 %v1446
      %v1478 = vunpack.c.l.b16 %v1447
      %v1479 = vunpack.c.l.b16 %v1448
      %v1480 = vunpack.c.l.b16 %v1449
      %v1481 = vpack.c.b16 %v1474, %v1473
      %v1482 = vpack.c.b16 %v1476, %v1475
      %v1483 = vpack.c.b16 %v1478, %v1477
      %v1484 = vpack.c.b16 %v1480, %v1479
      %v1490 = vsel %vm936, %v1451, 0
      %v1493 = vsel %vm936, %v1452, 0
      %v1496 = vsel %vm936, %v1453, 0
      %v1499 = vsel %vm936, %v1454, 0
      %v1502 = vsel %vm936, %v1455, 0
      %v1505 = vsel %vm936, %v1456, 0
      %v1508 = vsel %vm936, %v1457, 0
      %v1511 = vsel %vm936, %v1458, 0
      %1513 = vmatprep.subr.bf16.mxu0 0
      %1514 = vmatpush1.bf16.msra.mxu0 %v1481
      %1515 = vmatprep.subr.bf16.mxu0 0
      %1516 = vmatpush1.bf16.msra.mxu0 %v1482
      %1517 = vmatprep.subr.bf16.mxu0 0
      %1518 = vmatpush1.bf16.msra.mxu0 %v1483
      %1519 = vmatprep.subr.bf16.mxu0 0
      %1520 = vmatpush1.bf16.msra.mxu0 %v1484
      %1521 = vmatprep.subr.bf16.mxu0 0
      %1522 = vmatpush1.bf16.msra.mxu0 0
      %1523 = vmatprep.subr.bf16.mxu0 0
      %1524 = vmatpush1.bf16.msra.mxu0 0
      %1525 = vmatprep.subr.bf16.mxu0 0
      %1526 = vmatpush1.bf16.msra.mxu0 0
      %1527 = vmatprep.subr.bf16.mxu0 0
      %1528 = vmatpush1.bf16.msra.mxu0 0
      %1529 = vmatprep.subr.bf16.mxu0 0
      %1530 = vmatpush1.bf16.msra.mxu0 0
      %1531 = vmatprep.subr.bf16.mxu0 0
      %1532 = vmatpush1.bf16.msra.mxu0 0
      %1533 = vmatprep.subr.bf16.mxu0 0
      %1534 = vmatpush1.bf16.msra.mxu0 0
      %1535 = vmatprep.subr.bf16.mxu0 0
      %1536 = vmatpush1.bf16.msra.mxu0 0
      %1537 = vmatprep.subr.bf16.mxu0 0
      %1538 = vmatpush1.bf16.msra.mxu0 0
      %1539 = vmatprep.subr.bf16.mxu0 0
      %1540 = vmatpush1.bf16.msra.mxu0 0
      %1541 = vmatprep.subr.bf16.mxu0 0
      %1542 = vmatpush1.bf16.msra.mxu0 0
      %1543 = vmatprep.subr.bf16.mxu0 0
      %1544 = vmatpush1.bf16.msra.mxu0 0
      %1545 = vmatprep.mubr.bf16.mxu0 0
      %1546 = vmatmul.mubr.bf16.gmra.mrb[0].mxu0 %v1490
      %v1547 = vpop.f32.mrb[0].mxu0
      %v1548 = vadd.f32 %v1463, %v1547
      %v1549 = vpop.f32.mrb[0].mxu0
      %v1550 = vpop.f32.mrb[0].mxu0
      %v1551 = vadd.f32 %v1463, %v1550
      %v1552 = vpop.f32.mrb[0].mxu0
      %1553 = vmatprep.mubr.bf16.mxu0 0
      %1554 = vmatmul.mubr.bf16.gmra.mrb[0].mxu0 %v1493
      %v1555 = vpop.f32.mrb[0].mxu0
      %v1556 = vadd.f32 %v1463, %v1555
      %v1557 = vpop.f32.mrb[0].mxu0
      %v1558 = vpop.f32.mrb[0].mxu0
      %v1559 = vadd.f32 %v1463, %v1558
      %v1560 = vpop.f32.mrb[0].mxu0
      %1561 = vmatprep.mubr.bf16.mxu0 0
      %1562 = vmatmul.mubr.bf16.gmra.mrb[0].mxu0 %v1496
      %v1563 = vpop.f32.mrb[0].mxu0
      %v1564 = vadd.f32 %v1463, %v1563
      %v1565 = vpop.f32.mrb[0].mxu0
      %v1566 = vpop.f32.mrb[0].mxu0
      %v1567 = vadd.f32 %v1463, %v1566
      %v1568 = vpop.f32.mrb[0].mxu0
      %1569 = vmatprep.mubr.bf16.mxu0 0
      %1570 = vmatmul.mubr.bf16.gmra.mrb[0].mxu0 %v1499
      %v1571 = vpop.f32.mrb[0].mxu0
      %v1572 = vadd.f32 %v1463, %v1571
      %v1573 = vpop.f32.mrb[0].mxu0
      %v1574 = vpop.f32.mrb[0].mxu0
      %v1575 = vadd.f32 %v1463, %v1574
      %v1576 = vpop.f32.mrb[0].mxu0
      %1577 = vmatprep.mubr.bf16.mxu0 0
      %1578 = vmatmul.mubr.bf16.gmra.mrb[0].mxu0 %v1502
      %v1579 = vpop.f32.mrb[0].mxu0
      %v1580 = vadd.f32 %v1463, %v1579
      %v1581 = vpop.f32.mrb[0].mxu0
      %v1582 = vpop.f32.mrb[0].mxu0
      %v1583 = vadd.f32 %v1463, %v1582
      %v1584 = vpop.f32.mrb[0].mxu0
      %1585 = vmatprep.mubr.bf16.mxu0 0
      %1586 = vmatmul.mubr.bf16.gmra.mrb[0].mxu0 %v1505
      %v1587 = vpop.f32.mrb[0].mxu0
      %v1588 = vadd.f32 %v1463, %v1587
      %v1589 = vpop.f32.mrb[0].mxu0
      %v1590 = vpop.f32.mrb[0].mxu0
      %v1591 = vadd.f32 %v1463, %v1590
      %v1592 = vpop.f32.mrb[0].mxu0
      %1593 = vmatprep.mubr.bf16.mxu0 0
      %1594 = vmatmul.mubr.bf16.gmra.mrb[0].mxu0 %v1508
      %v1595 = vpop.f32.mrb[0].mxu0
      %v1596 = vadd.f32 %v1463, %v1595
      %v1597 = vpop.f32.mrb[0].mxu0
      %v1598 = vpop.f32.mrb[0].mxu0
      %v1599 = vadd.f32 %v1463, %v1598
      %v1600 = vpop.f32.mrb[0].mxu0
      %1601 = vmatprep.mubr.bf16.mxu0 0
      %1602 = vmatmul.mubr.bf16.gmra.mrb[0].mxu0 %v1511
      %v1603 = vpop.f32.mrb[0].mxu0
      %v1604 = vadd.f32 %v1463, %v1603
      %v1605 = vpop.f32.mrb[0].mxu0
      %v1606 = vpop.f32.mrb[0].mxu0
      %v1607 = vadd.f32 %v1463, %v1606
      %v1608 = vpop.f32.mrb[0].mxu0
      %1609 = vdwg.mxu0
      %v1610 = vmax.f32 %v1548, 0.0
      %v1611 = vmax.f32 %v1551, 0.0
      %v1612 = vmax.f32 %v1556, 0.0
      %v1613 = vmax.f32 %v1559, 0.0
      %v1614 = vmax.f32 %v1564, 0.0
      %v1615 = vmax.f32 %v1567, 0.0
      %v1616 = vmax.f32 %v1572, 0.0
      %v1617 = vmax.f32 %v1575, 0.0
      %v1618 = vmax.f32 %v1580, 0.0
      %v1619 = vmax.f32 %v1583, 0.0
      %v1620 = vmax.f32 %v1588, 0.0
      %v1621 = vmax.f32 %v1591, 0.0
      %v1622 = vmax.f32 %v1596, 0.0
      %v1623 = vmax.f32 %v1599, 0.0
      %v1624 = vmax.f32 %v1604, 0.0
      %v1625 = vmax.f32 %v1607, 0.0
      %v1626 = vld [vmem:[%s12] sm:$0xf]
      %v1627 = vld [vmem:[%s13] sm:$0xf]
      %v1628 = vld [vmem:[%s13 + $0x4] sm:$0xf]
      %v1629 = vld [vmem:[%s13 + $0x8] sm:$0xf]
      %v1630 = vld [vmem:[%s13 + $0xc] sm:$0xf]
      %v1631 = vld [vmem:[%s13 + $0x10] sm:$0xf]
      %v1632 = vld [vmem:[%s13 + $0x14] sm:$0xf]
      %v1633 = vld [vmem:[%s13 + $0x18] sm:$0xf]
      %v1634 = vld [vmem:[%s13 + $0x1c] sm:$0xf]
      %v1635 = vld [vmem:[%s14] sm:$0x1]
      %v1636 = vpack.c.bf16 %v1611, %v1610
      %v1637 = vpack.c.bf16 %v1613, %v1612
      %v1638 = vpack.c.bf16 %v1615, %v1614
      %v1639 = vpack.c.bf16 %v1617, %v1616
      %v1640 = vpack.c.bf16 %v1619, %v1618
      %v1641 = vpack.c.bf16 %v1621, %v1620
      %v1642 = vpack.c.bf16 %v1623, %v1622
      %v1643 = vpack.c.bf16 %v1625, %v1624
      %v1652 = vunpack.c.l.b16 %v1627
      %v1653 = vunpack.c.l.b16 %v1628
      %v1654 = vunpack.c.l.b16 %v1629
      %v1655 = vunpack.c.l.b16 %v1630
      %v1656 = vunpack.c.l.b16 %v1631
      %v1657 = vunpack.c.l.b16 %v1632
      %v1658 = vunpack.c.l.b16 %v1633
      %v1659 = vunpack.c.l.b16 %v1634
      %v1660 = vpack.c.b16 %v1653, %v1652
      %v1661 = vpack.c.b16 %v1655, %v1654
      %v1662 = vpack.c.b16 %v1657, %v1656
      %v1663 = vpack.c.b16 %v1659, %v1658
      %v1669 = vsel %vm936, %v1636, 0
      %v1672 = vsel %vm936, %v1637, 0
      %v1675 = vsel %vm936, %v1638, 0
      %v1678 = vsel %vm936, %v1639, 0
      %v1681 = vsel %vm936, %v1640, 0
      %v1684 = vsel %vm936, %v1641, 0
      %v1687 = vsel %vm936, %v1642, 0
      %v1690 = vsel %vm936, %v1643, 0
      %1692 = vmatprep.subr.bf16.mxu0 0
      %1693 = vmatpush1.bf16.msra.mxu0 %v1660
      %1694 = vmatprep.subr.bf16.mxu0 0
      %1695 = vmatpush1.bf16.msra.mxu0 %v1661
      %1696 = vmatprep.subr.bf16.mxu0 0
      %1697 = vmatpush1.bf16.msra.mxu0 %v1662
      %1698 = vmatprep.subr.bf16.mxu0 0
      %1699 = vmatpush1.bf16.msra.mxu0 %v1663
      %1700 = vmatprep.subr.bf16.mxu0 0
      %1701 = vmatpush1.bf16.msra.mxu0 0
      %1702 = vmatprep.subr.bf16.mxu0 0
      %1703 = vmatpush1.bf16.msra.mxu0 0
      %1704 = vmatprep.subr.bf16.mxu0 0
      %1705 = vmatpush1.bf16.msra.mxu0 0
      %1706 = vmatprep.subr.bf16.mxu0 0
      %1707 = vmatpush1.bf16.msra.mxu0 0
      %1708 = vmatprep.subr.bf16.mxu0 0
      %1709 = vmatpush1.bf16.msra.mxu0 0
      %1710 = vmatprep.subr.bf16.mxu0 0
      %1711 = vmatpush1.bf16.msra.mxu0 0
      %1712 = vmatprep.subr.bf16.mxu0 0
      %1713 = vmatpush1.bf16.msra.mxu0 0
      %1714 = vmatprep.subr.bf16.mxu0 0
      %1715 = vmatpush1.bf16.msra.mxu0 0
      %1716 = vmatprep.subr.bf16.mxu0 0
      %1717 = vmatpush1.bf16.msra.mxu0 0
      %1718 = vmatprep.subr.bf16.mxu0 0
      %1719 = vmatpush1.bf16.msra.mxu0 0
      %1720 = vmatprep.subr.bf16.mxu0 0
      %1721 = vmatpush1.bf16.msra.mxu0 0
      %1722 = vmatprep.subr.bf16.mxu0 0
      %1723 = vmatpush1.bf16.msra.mxu0 0
      %1724 = vmatprep.mubr.bf16.mxu0 0
      %1725 = vmatmul.mubr.bf16.gmra.mrb[0].mxu0 %v1669
      %v1726 = vpop.f32.mrb[0].mxu0
      %v1727 = vadd.f32 0.0, %v1726
      %v1728 = vpop.f32.mrb[0].mxu0
      %v1729 = vpop.f32.mrb[0].mxu0
      %v1730 = vadd.f32 0.0, %v1729
      %v1731 = vpop.f32.mrb[0].mxu0
      %1732 = vmatprep.mubr.bf16.mxu0 0
      %1733 = vmatmul.mubr.bf16.gmra.mrb[0].mxu0 %v1672
      %v1734 = vpop.f32.mrb[0].mxu0
      %v1735 = vadd.f32 0.0, %v1734
      %v1736 = vpop.f32.mrb[0].mxu0
      %v1737 = vpop.f32.mrb[0].mxu0
      %v1738 = vadd.f32 0.0, %v1737
      %v1739 = vpop.f32.mrb[0].mxu0
      %1740 = vmatprep.mubr.bf16.mxu0 0
      %1741 = vmatmul.mubr.bf16.gmra.mrb[0].mxu0 %v1675
      %v1742 = vpop.f32.mrb[0].mxu0
      %v1743 = vadd.f32 0.0, %v1742
      %v1744 = vpop.f32.mrb[0].mxu0
      %v1745 = vpop.f32.mrb[0].mxu0
      %v1746 = vadd.f32 0.0, %v1745
      %v1747 = vpop.f32.mrb[0].mxu0
      %1748 = vmatprep.mubr.bf16.mxu0 0
      %1749 = vmatmul.mubr.bf16.gmra.mrb[0].mxu0 %v1678
      %v1750 = vpop.f32.mrb[0].mxu0
      %v1751 = vadd.f32 0.0, %v1750
      %v1752 = vpop.f32.mrb[0].mxu0
      %v1753 = vpop.f32.mrb[0].mxu0
      %v1754 = vadd.f32 0.0, %v1753
      %v1755 = vpop.f32.mrb[0].mxu0
      %1756 = vmatprep.mubr.bf16.mxu0 0
      %1757 = vmatmul.mubr.bf16.gmra.mrb[0].mxu0 %v1681
      %v1758 = vpop.f32.mrb[0].mxu0
      %v1759 = vadd.f32 0.0, %v1758
      %v1760 = vpop.f32.mrb[0].mxu0
      %v1761 = vpop.f32.mrb[0].mxu0
      %v1762 = vadd.f32 0.0, %v1761
      %v1763 = vpop.f32.mrb[0].mxu0
      %1764 = vmatprep.mubr.bf16.mxu0 0
      %1765 = vmatmul.mubr.bf16.gmra.mrb[0].mxu0 %v1684
      %v1766 = vpop.f32.mrb[0].mxu0
      %v1767 = vadd.f32 0.0, %v1766
      %v1768 = vpop.f32.mrb[0].mxu0
      %v1769 = vpop.f32.mrb[0].mxu0
      %v1770 = vadd.f32 0.0, %v1769
      %v1771 = vpop.f32.mrb[0].mxu0
      %1772 = vmatprep.mubr.bf16.mxu0 0
      %1773 = vmatmul.mubr.bf16.gmra.mrb[0].mxu0 %v1687
      %v1774 = vpop.f32.mrb[0].mxu0
      %v1775 = vadd.f32 0.0, %v1774
      %v1776 = vpop.f32.mrb[0].mxu0
      %v1777 = vpop.f32.mrb[0].mxu0
      %v1778 = vadd.f32 0.0, %v1777
      %v1779 = vpop.f32.mrb[0].mxu0
      %1780 = vmatprep.mubr.bf16.mxu0 0
      %1781 = vmatmul.mubr.bf16.gmra.mrb[0].mxu0 %v1690
      %v1782 = vpop.f32.mrb[0].mxu0
      %v1783 = vadd.f32 0.0, %v1782
      %v1784 = vpop.f32.mrb[0].mxu0
      %v1785 = vpop.f32.mrb[0].mxu0
      %v1786 = vadd.f32 0.0, %v1785
      %v1787 = vpop.f32.mrb[0].mxu0
      %1788 = vdwg.mxu0
      %v1790 = vsel %vm772, %v1626, 0
      %1792 = vmatprep.subr.bf16.mxu0 0
      %1793 = vmatpush1.bf16.msra.mxu0 %v1790
      %1794 = vmatprep.subr.bf16.mxu0 0
      %1795 = vmatpush1.bf16.msra.mxu0 0
      %1796 = vmatprep.subr.bf16.mxu0 0
      %1797 = vmatpush1.bf16.msra.mxu0 0
      %1798 = vmatprep.subr.bf16.mxu0 0
      %1799 = vmatpush1.bf16.msra.mxu0 0
      %1800 = vmatprep.subr.bf16.mxu0 0
      %1801 = vmatpush1.bf16.msra.mxu0 0
      %1802 = vmatprep.subr.bf16.mxu0 0
      %1803 = vmatpush1.bf16.msra.mxu0 0
      %1804 = vmatprep.subr.bf16.mxu0 0
      %1805 = vmatpush1.bf16.msra.mxu0 0
      %1806 = vmatprep.subr.bf16.mxu0 0
      %1807 = vmatpush1.bf16.msra.mxu0 0
      %1808 = vmatprep.subr.bf16.mxu0 0
      %1809 = vmatpush1.bf16.msra.mxu0 0
      %1810 = vmatprep.subr.bf16.mxu0 0
      %1811 = vmatpush1.bf16.msra.mxu0 0
      %1812 = vmatprep.subr.bf16.mxu0 0
      %1813 = vmatpush1.bf16.msra.mxu0 0
      %1814 = vmatprep.subr.bf16.mxu0 0
      %1815 = vmatpush1.bf16.msra.mxu0 0
      %1816 = vmatprep.subr.bf16.mxu0 0
      %1817 = vmatpush1.bf16.msra.mxu0 0
      %1818 = vmatprep.subr.bf16.mxu0 0
      %1819 = vmatpush1.bf16.msra.mxu0 0
      %1820 = vmatprep.subr.bf16.mxu0 0
      %1821 = vmatpush1.bf16.msra.mxu0 0
      %1822 = vmatprep.subr.bf16.mxu0 0
      %1823 = vmatpush1.bf16.msra.mxu0 0
      %1824 = vmatprep.mubr.bf16.mxu0 0
      %1825 = vmatmul.mubr.bf16.gmra.mrb[0].mxu0 %v749
      %v1826 = vpop.f32.mrb[0].mxu0
      %v1827 = vadd.f32 %v1727, %v1826
      %v1828 = vpop.f32.mrb[0].mxu0
      %v1829 = vpop.f32.mrb[0].mxu0
      %v1830 = vadd.f32 %v1730, %v1829
      %v1831 = vpop.f32.mrb[0].mxu0
      %1832 = vmatprep.mubr.bf16.mxu0 0
      %1833 = vmatmul.mubr.bf16.gmra.mrb[0].mxu0 %v752
      %v1834 = vpop.f32.mrb[0].mxu0
      %v1835 = vadd.f32 %v1735, %v1834
      %v1836 = vpop.f32.mrb[0].mxu0
      %v1837 = vpop.f32.mrb[0].mxu0
      %v1838 = vadd.f32 %v1738, %v1837
      %v1839 = vpop.f32.mrb[0].mxu0
      %1840 = vmatprep.mubr.bf16.mxu0 0
      %1841 = vmatmul.mubr.bf16.gmra.mrb[0].mxu0 %v755
      %v1842 = vpop.f32.mrb[0].mxu0
      %v1843 = vadd.f32 %v1743, %v1842
      %v1844 = vpop.f32.mrb[0].mxu0
      %v1845 = vpop.f32.mrb[0].mxu0
      %v1846 = vadd.f32 %v1746, %v1845
      %v1847 = vpop.f32.mrb[0].mxu0
      %1848 = vmatprep.mubr.bf16.mxu0 0
      %1849 = vmatmul.mubr.bf16.gmra.mrb[0].mxu0 %v758
      %v1850 = vpop.f32.mrb[0].mxu0
      %v1851 = vadd.f32 %v1751, %v1850
      %v1852 = vpop.f32.mrb[0].mxu0
      %v1853 = vpop.f32.mrb[0].mxu0
      %v1854 = vadd.f32 %v1754, %v1853
      %v1855 = vpop.f32.mrb[0].mxu0
      %1856 = vmatprep.mubr.bf16.mxu0 0
      %1857 = vmatmul.mubr.bf16.gmra.mrb[0].mxu0 %v761
      %v1858 = vpop.f32.mrb[0].mxu0
      %v1859 = vadd.f32 %v1759, %v1858
      %v1860 = vpop.f32.mrb[0].mxu0
      %v1861 = vpop.f32.mrb[0].mxu0
      %v1862 = vadd.f32 %v1762, %v1861
      %v1863 = vpop.f32.mrb[0].mxu0
      %1864 = vmatprep.mubr.bf16.mxu0 0
      %1865 = vmatmul.mubr.bf16.gmra.mrb[0].mxu0 %v764
      %v1866 = vpop.f32.mrb[0].mxu0
      %v1867 = vadd.f32 %v1767, %v1866
      %v1868 = vpop.f32.mrb[0].mxu0
      %v1869 = vpop.f32.mrb[0].mxu0
      %v1870 = vadd.f32 %v1770, %v1869
      %v1871 = vpop.f32.mrb[0].mxu0
      %1872 = vmatprep.mubr.bf16.mxu0 0
      %1873 = vmatmul.mubr.bf16.gmra.mrb[0].mxu0 %v767
      %v1874 = vpop.f32.mrb[0].mxu0
      %v1875 = vadd.f32 %v1775, %v1874
      %v1876 = vpop.f32.mrb[0].mxu0
      %v1877 = vpop.f32.mrb[0].mxu0
      %v1878 = vadd.f32 %v1778, %v1877
      %v1879 = vpop.f32.mrb[0].mxu0
      %1880 = vmatprep.mubr.bf16.mxu0 0
      %1881 = vmatmul.mubr.bf16.gmra.mrb[0].mxu0 %v770
      %v1882 = vpop.f32.mrb[0].mxu0
      %v1883 = vadd.f32 %v1783, %v1882
      %v1884 = vpop.f32.mrb[0].mxu0
      %v1885 = vpop.f32.mrb[0].mxu0
      %v1886 = vadd.f32 %v1786, %v1885
      %v1887 = vpop.f32.mrb[0].mxu0
      %1888 = vdwg.mxu0
      %v1890 = vlaneseq
      %v1891 = vshrl.u32 %v1890, 7
      %v1892 = vsub.s32 0, %v1891
      %v1893 = vrot.slane %v1635, %v1892
      %v1895 = vadd.f32 %v1827, %v1893
      %v1896 = vadd.f32 %v1830, %v1893
      %v1897 = vadd.f32 %v1835, %v1893
      %v1898 = vadd.f32 %v1838, %v1893
      %v1899 = vadd.f32 %v1843, %v1893
      %v1900 = vadd.f32 %v1846, %v1893
      %v1901 = vadd.f32 %v1851, %v1893
      %v1902 = vadd.f32 %v1854, %v1893
      %v1903 = vadd.f32 %v1859, %v1893
      %v1904 = vadd.f32 %v1862, %v1893
      %v1905 = vadd.f32 %v1867, %v1893
      %v1906 = vadd.f32 %v1870, %v1893
      %v1907 = vadd.f32 %v1875, %v1893
      %v1908 = vadd.f32 %v1878, %v1893
      %v1909 = vadd.f32 %v1883, %v1893
      %v1910 = vadd.f32 %v1886, %v1893
      %v1911 = vmax.f32 %v1895, 0.0
      %v1912 = vmax.f32 %v1896, 0.0
      %v1913 = vmax.f32 %v1897, 0.0
      %v1914 = vmax.f32 %v1898, 0.0
      %v1915 = vmax.f32 %v1899, 0.0
      %v1916 = vmax.f32 %v1900, 0.0
      %v1917 = vmax.f32 %v1901, 0.0
      %v1918 = vmax.f32 %v1902, 0.0
      %v1919 = vmax.f32 %v1903, 0.0
      %v1920 = vmax.f32 %v1904, 0.0
      %v1921 = vmax.f32 %v1905, 0.0
      %v1922 = vmax.f32 %v1906, 0.0
      %v1923 = vmax.f32 %v1907, 0.0
      %v1924 = vmax.f32 %v1908, 0.0
      %v1925 = vmax.f32 %v1909, 0.0
      %v1926 = vmax.f32 %v1910, 0.0
      %v1927 = vld [vmem:[%s15] sm:$0xf]
      %v1928 = vld [vmem:[%s15 + $0x4] sm:$0xf]
      %v1929 = vld [vmem:[%s15 + $0x8] sm:$0xf]
      %v1930 = vld [vmem:[%s15 + $0xc] sm:$0xf]
      %v1931 = vld [vmem:[%s15 + $0x10] sm:$0xf]
      %v1932 = vld [vmem:[%s15 + $0x14] sm:$0xf]
      %v1933 = vld [vmem:[%s15 + $0x18] sm:$0xf]
      %v1934 = vld [vmem:[%s15 + $0x1c] sm:$0xf]
      %v1935 = vld [vmem:[%s16] sm:$0x1]
      %v1936 = vpack.c.bf16 %v1912, %v1911
      %v1937 = vpack.c.bf16 %v1914, %v1913
      %v1938 = vpack.c.bf16 %v1916, %v1915
      %v1939 = vpack.c.bf16 %v1918, %v1917
      %v1940 = vpack.c.bf16 %v1920, %v1919
      %v1941 = vpack.c.bf16 %v1922, %v1921
      %v1942 = vpack.c.bf16 %v1924, %v1923
      %v1943 = vpack.c.bf16 %v1926, %v1925
      %v1945 = vlaneseq
      %v1946 = vshrl.u32 %v1945, 7
      %v1947 = vsub.s32 0, %v1946
      %v1948 = vrot.slane %v1935, %v1947
      %v1958 = vunpack.c.l.b16 %v1927
      %v1959 = vunpack.c.l.b16 %v1928
      %v1960 = vunpack.c.l.b16 %v1929
      %v1961 = vunpack.c.l.b16 %v1930
      %v1962 = vunpack.c.l.b16 %v1931
      %v1963 = vunpack.c.l.b16 %v1932
      %v1964 = vunpack.c.l.b16 %v1933
      %v1965 = vunpack.c.l.b16 %v1934
      %v1966 = vpack.c.b16 %v1959, %v1958
      %v1967 = vpack.c.b16 %v1961, %v1960
      %v1968 = vpack.c.b16 %v1963, %v1962
      %v1969 = vpack.c.b16 %v1965, %v1964
      %v1975 = vsel %vm936, %v1936, 0
      %v1978 = vsel %vm936, %v1937, 0
      %v1981 = vsel %vm936, %v1938, 0
      %v1984 = vsel %vm936, %v1939, 0
      %v1987 = vsel %vm936, %v1940, 0
      %v1990 = vsel %vm936, %v1941, 0
      %v1993 = vsel %vm936, %v1942, 0
      %v1996 = vsel %vm936, %v1943, 0
      %1998 = vmatprep.subr.bf16.mxu0 0
      %1999 = vmatpush1.bf16.msra.mxu0 %v1966
      %2000 = vmatprep.subr.bf16.mxu0 0
      %2001 = vmatpush1.bf16.msra.mxu0 %v1967
      %2002 = vmatprep.subr.bf16.mxu0 0
      %2003 = vmatpush1.bf16.msra.mxu0 %v1968
      %2004 = vmatprep.subr.bf16.mxu0 0
      %2005 = vmatpush1.bf16.msra.mxu0 %v1969
      %2006 = vmatprep.subr.bf16.mxu0 0
      %2007 = vmatpush1.bf16.msra.mxu0 0
      %2008 = vmatprep.subr.bf16.mxu0 0
      %2009 = vmatpush1.bf16.msra.mxu0 0
      %2010 = vmatprep.subr.bf16.mxu0 0
      %2011 = vmatpush1.bf16.msra.mxu0 0
      %2012 = vmatprep.subr.bf16.mxu0 0
      %2013 = vmatpush1.bf16.msra.mxu0 0
      %2014 = vmatprep.subr.bf16.mxu0 0
      %2015 = vmatpush1.bf16.msra.mxu0 0
      %2016 = vmatprep.subr.bf16.mxu0 0
      %2017 = vmatpush1.bf16.msra.mxu0 0
      %2018 = vmatprep.subr.bf16.mxu0 0
      %2019 = vmatpush1.bf16.msra.mxu0 0
      %2020 = vmatprep.subr.bf16.mxu0 0
      %2021 = vmatpush1.bf16.msra.mxu0 0
      %2022 = vmatprep.subr.bf16.mxu0 0
      %2023 = vmatpush1.bf16.msra.mxu0 0
      %2024 = vmatprep.subr.bf16.mxu0 0
      %2025 = vmatpush1.bf16.msra.mxu0 0
      %2026 = vmatprep.subr.bf16.mxu0 0
      %2027 = vmatpush1.bf16.msra.mxu0 0
      %2028 = vmatprep.subr.bf16.mxu0 0
      %2029 = vmatpush1.bf16.msra.mxu0 0
      %2030 = vmatprep.mubr.bf16.mxu0 0
      %2031 = vmatmul.mubr.bf16.gmra.mrb[0].mxu0 %v1975
      %v2032 = vpop.f32.mrb[0].mxu0
      %v2033 = vadd.f32 %v1948, %v2032
      %v2034 = vpop.f32.mrb[0].mxu0
      %v2035 = vpop.f32.mrb[0].mxu0
      %v2036 = vadd.f32 %v1948, %v2035
      %v2037 = vpop.f32.mrb[0].mxu0
      %2038 = vmatprep.mubr.bf16.mxu0 0
      %2039 = vmatmul.mubr.bf16.gmra.mrb[0].mxu0 %v1978
      %v2040 = vpop.f32.mrb[0].mxu0
      %v2041 = vadd.f32 %v1948, %v2040
      %v2042 = vpop.f32.mrb[0].mxu0
      %v2043 = vpop.f32.mrb[0].mxu0
      %v2044 = vadd.f32 %v1948, %v2043
      %v2045 = vpop.f32.mrb[0].mxu0
      %2046 = vmatprep.mubr.bf16.mxu0 0
      %2047 = vmatmul.mubr.bf16.gmra.mrb[0].mxu0 %v1981
      %v2048 = vpop.f32.mrb[0].mxu0
      %v2049 = vadd.f32 %v1948, %v2048
      %v2050 = vpop.f32.mrb[0].mxu0
      %v2051 = vpop.f32.mrb[0].mxu0
      %v2052 = vadd.f32 %v1948, %v2051
      %v2053 = vpop.f32.mrb[0].mxu0
      %2054 = vmatprep.mubr.bf16.mxu0 0
      %2055 = vmatmul.mubr.bf16.gmra.mrb[0].mxu0 %v1984
      %v2056 = vpop.f32.mrb[0].mxu0
      %v2057 = vadd.f32 %v1948, %v2056
      %v2058 = vpop.f32.mrb[0].mxu0
      %v2059 = vpop.f32.mrb[0].mxu0
      %v2060 = vadd.f32 %v1948, %v2059
      %v2061 = vpop.f32.mrb[0].mxu0
      %2062 = vmatprep.mubr.bf16.mxu0 0
      %2063 = vmatmul.mubr.bf16.gmra.mrb[0].mxu0 %v1987
      %v2064 = vpop.f32.mrb[0].mxu0
      %v2065 = vadd.f32 %v1948, %v2064
      %v2066 = vpop.f32.mrb[0].mxu0
      %v2067 = vpop.f32.mrb[0].mxu0
      %v2068 = vadd.f32 %v1948, %v2067
      %v2069 = vpop.f32.mrb[0].mxu0
      %2070 = vmatprep.mubr.bf16.mxu0 0
      %2071 = vmatmul.mubr.bf16.gmra.mrb[0].mxu0 %v1990
      %v2072 = vpop.f32.mrb[0].mxu0
      %v2073 = vadd.f32 %v1948, %v2072
      %v2074 = vpop.f32.mrb[0].mxu0
      %v2075 = vpop.f32.mrb[0].mxu0
      %v2076 = vadd.f32 %v1948, %v2075
      %v2077 = vpop.f32.mrb[0].mxu0
      %2078 = vmatprep.mubr.bf16.mxu0 0
      %2079 = vmatmul.mubr.bf16.gmra.mrb[0].mxu0 %v1993
      %v2080 = vpop.f32.mrb[0].mxu0
      %v2081 = vadd.f32 %v1948, %v2080
      %v2082 = vpop.f32.mrb[0].mxu0
      %v2083 = vpop.f32.mrb[0].mxu0
      %v2084 = vadd.f32 %v1948, %v2083
      %v2085 = vpop.f32.mrb[0].mxu0
      %2086 = vmatprep.mubr.bf16.mxu0 0
      %2087 = vmatmul.mubr.bf16.gmra.mrb[0].mxu0 %v1996
      %v2088 = vpop.f32.mrb[0].mxu0
      %v2089 = vadd.f32 %v1948, %v2088
      %v2090 = vpop.f32.mrb[0].mxu0
      %v2091 = vpop.f32.mrb[0].mxu0
      %v2092 = vadd.f32 %v1948, %v2091
      %v2093 = vpop.f32.mrb[0].mxu0
      %2094 = vdwg.mxu0
      %v2095 = vmax.f32 %v2033, 0.0
      %v2096 = vmax.f32 %v2036, 0.0
      %v2097 = vmax.f32 %v2041, 0.0
      %v2098 = vmax.f32 %v2044, 0.0
      %v2099 = vmax.f32 %v2049, 0.0
      %v2100 = vmax.f32 %v2052, 0.0
      %v2101 = vmax.f32 %v2057, 0.0
      %v2102 = vmax.f32 %v2060, 0.0
      %v2103 = vmax.f32 %v2065, 0.0
      %v2104 = vmax.f32 %v2068, 0.0
      %v2105 = vmax.f32 %v2073, 0.0
      %v2106 = vmax.f32 %v2076, 0.0
      %v2107 = vmax.f32 %v2081, 0.0
      %v2108 = vmax.f32 %v2084, 0.0
      %v2109 = vmax.f32 %v2089, 0.0
      %v2110 = vmax.f32 %v2092, 0.0
      %v2111 = vld [vmem:[%s17] sm:$0xf]
      %v2112 = vld [vmem:[%s17 + $0x4] sm:$0xf]
      %v2113 = vld [vmem:[%s17 + $0x8] sm:$0xf]
      %v2114 = vld [vmem:[%s17 + $0xc] sm:$0xf]
      %v2115 = vld [vmem:[%s17 + $0x10] sm:$0xf]
      %v2116 = vld [vmem:[%s17 + $0x14] sm:$0xf]
      %v2117 = vld [vmem:[%s17 + $0x18] sm:$0xf]
      %v2118 = vld [vmem:[%s17 + $0x1c] sm:$0xf]
      %v2119 = vld [vmem:[%s18] sm:$0x1]
      %v2120 = vpack.c.bf16 %v2096, %v2095
      %v2121 = vpack.c.bf16 %v2098, %v2097
      %v2122 = vpack.c.bf16 %v2100, %v2099
      %v2123 = vpack.c.bf16 %v2102, %v2101
      %v2124 = vpack.c.bf16 %v2104, %v2103
      %v2125 = vpack.c.bf16 %v2106, %v2105
      %v2126 = vpack.c.bf16 %v2108, %v2107
      %v2127 = vpack.c.bf16 %v2110, %v2109
      %v2129 = vlaneseq
      %v2130 = vshrl.u32 %v2129, 7
      %v2131 = vsub.s32 0, %v2130
      %v2132 = vrot.slane %v2119, %v2131
      %v2142 = vunpack.c.l.b16 %v2111
      %v2143 = vunpack.c.l.b16 %v2112
      %v2144 = vunpack.c.l.b16 %v2113
      %v2145 = vunpack.c.l.b16 %v2114
      %v2146 = vunpack.c.l.b16 %v2115
      %v2147 = vunpack.c.l.b16 %v2116
      %v2148 = vunpack.c.l.b16 %v2117
      %v2149 = vunpack.c.l.b16 %v2118
      %v2150 = vpack.c.b16 %v2143, %v2142
      %v2151 = vpack.c.b16 %v2145, %v2144
      %v2152 = vpack.c.b16 %v2147, %v2146
      %v2153 = vpack.c.b16 %v2149, %v2148
      %v2159 = vsel %vm936, %v2120, 0
      %v2162 = vsel %vm936, %v2121, 0
      %v2165 = vsel %vm936, %v2122, 0
      %v2168 = vsel %vm936, %v2123, 0
      %v2171 = vsel %vm936, %v2124, 0
      %v2174 = vsel %vm936, %v2125, 0
      %v2177 = vsel %vm936, %v2126, 0
      %v2180 = vsel %vm936, %v2127, 0
      %2182 = vmatprep.subr.bf16.mxu0 0
      %2183 = vmatpush1.bf16.msra.mxu0 %v2150
      %2184 = vmatprep.subr.bf16.mxu0 0
      %2185 = vmatpush1.bf16.msra.mxu0 %v2151
      %2186 = vmatprep.subr.bf16.mxu0 0
      %2187 = vmatpush1.bf16.msra.mxu0 %v2152
      %2188 = vmatprep.subr.bf16.mxu0 0
      %2189 = vmatpush1.bf16.msra.mxu0 %v2153
      %2190 = vmatprep.subr.bf16.mxu0 0
      %2191 = vmatpush1.bf16.msra.mxu0 0
      %2192 = vmatprep.subr.bf16.mxu0 0
      %2193 = vmatpush1.bf16.msra.mxu0 0
      %2194 = vmatprep.subr.bf16.mxu0 0
      %2195 = vmatpush1.bf16.msra.mxu0 0
      %2196 = vmatprep.subr.bf16.mxu0 0
      %2197 = vmatpush1.bf16.msra.mxu0 0
      %2198 = vmatprep.subr.bf16.mxu0 0
      %2199 = vmatpush1.bf16.msra.mxu0 0
      %2200 = vmatprep.subr.bf16.mxu0 0
      %2201 = vmatpush1.bf16.msra.mxu0 0
      %2202 = vmatprep.subr.bf16.mxu0 0
      %2203 = vmatpush1.bf16.msra.mxu0 0
      %2204 = vmatprep.subr.bf16.mxu0 0
      %2205 = vmatpush1.bf16.msra.mxu0 0
      %2206 = vmatprep.subr.bf16.mxu0 0
      %2207 = vmatpush1.bf16.msra.mxu0 0
      %2208 = vmatprep.subr.bf16.mxu0 0
      %2209 = vmatpush1.bf16.msra.mxu0 0
      %2210 = vmatprep.subr.bf16.mxu0 0
      %2211 = vmatpush1.bf16.msra.mxu0 0
      %2212 = vmatprep.subr.bf16.mxu0 0
      %2213 = vmatpush1.bf16.msra.mxu0 0
      %2214 = vmatprep.mubr.bf16.mxu0 0
      %2215 = vmatmul.mubr.bf16.gmra.mrb[0].mxu0 %v2159
      %v2216 = vpop.f32.mrb[0].mxu0
      %v2217 = vadd.f32 %v2132, %v2216
      %v2218 = vpop.f32.mrb[0].mxu0
      %v2219 = vpop.f32.mrb[0].mxu0
      %v2220 = vadd.f32 %v2132, %v2219
      %v2221 = vpop.f32.mrb[0].mxu0
      %2222 = vmatprep.mubr.bf16.mxu0 0
      %2223 = vmatmul.mubr.bf16.gmra.mrb[0].mxu0 %v2162
      %v2224 = vpop.f32.mrb[0].mxu0
      %v2225 = vadd.f32 %v2132, %v2224
      %v2226 = vpop.f32.mrb[0].mxu0
      %v2227 = vpop.f32.mrb[0].mxu0
      %v2228 = vadd.f32 %v2132, %v2227
      %v2229 = vpop.f32.mrb[0].mxu0
      %2230 = vmatprep.mubr.bf16.mxu0 0
      %2231 = vmatmul.mubr.bf16.gmra.mrb[0].mxu0 %v2165
      %v2232 = vpop.f32.mrb[0].mxu0
      %v2233 = vadd.f32 %v2132, %v2232
      %v2234 = vpop.f32.mrb[0].mxu0
      %v2235 = vpop.f32.mrb[0].mxu0
      %v2236 = vadd.f32 %v2132, %v2235
      %v2237 = vpop.f32.mrb[0].mxu0
      %2238 = vmatprep.mubr.bf16.mxu0 0
      %2239 = vmatmul.mubr.bf16.gmra.mrb[0].mxu0 %v2168
      %v2240 = vpop.f32.mrb[0].mxu0
      %v2241 = vadd.f32 %v2132, %v2240
      %v2242 = vpop.f32.mrb[0].mxu0
      %v2243 = vpop.f32.mrb[0].mxu0
      %v2244 = vadd.f32 %v2132, %v2243
      %v2245 = vpop.f32.mrb[0].mxu0
      %2246 = vmatprep.mubr.bf16.mxu0 0
      %2247 = vmatmul.mubr.bf16.gmra.mrb[0].mxu0 %v2171
      %v2248 = vpop.f32.mrb[0].mxu0
      %v2249 = vadd.f32 %v2132, %v2248
      %v2250 = vpop.f32.mrb[0].mxu0
      %v2251 = vpop.f32.mrb[0].mxu0
      %v2252 = vadd.f32 %v2132, %v2251
      %v2253 = vpop.f32.mrb[0].mxu0
      %2254 = vmatprep.mubr.bf16.mxu0 0
      %2255 = vmatmul.mubr.bf16.gmra.mrb[0].mxu0 %v2174
      %v2256 = vpop.f32.mrb[0].mxu0
      %v2257 = vadd.f32 %v2132, %v2256
      %v2258 = vpop.f32.mrb[0].mxu0
      %v2259 = vpop.f32.mrb[0].mxu0
      %v2260 = vadd.f32 %v2132, %v2259
      %v2261 = vpop.f32.mrb[0].mxu0
      %2262 = vmatprep.mubr.bf16.mxu0 0
      %2263 = vmatmul.mubr.bf16.gmra.mrb[0].mxu0 %v2177
      %v2264 = vpop.f32.mrb[0].mxu0
      %v2265 = vadd.f32 %v2132, %v2264
      %v2266 = vpop.f32.mrb[0].mxu0
      %v2267 = vpop.f32.mrb[0].mxu0
      %v2268 = vadd.f32 %v2132, %v2267
      %v2269 = vpop.f32.mrb[0].mxu0
      %2270 = vmatprep.mubr.bf16.mxu0 0
      %2271 = vmatmul.mubr.bf16.gmra.mrb[0].mxu0 %v2180
      %v2272 = vpop.f32.mrb[0].mxu0
      %v2273 = vadd.f32 %v2132, %v2272
      %v2274 = vpop.f32.mrb[0].mxu0
      %v2275 = vpop.f32.mrb[0].mxu0
      %v2276 = vadd.f32 %v2132, %v2275
      %v2277 = vpop.f32.mrb[0].mxu0
      %2278 = vdwg.mxu0
      %v2279 = vmax.f32 %v2217, 0.0
      %v2280 = vmax.f32 %v2220, 0.0
      %v2281 = vmax.f32 %v2225, 0.0
      %v2282 = vmax.f32 %v2228, 0.0
      %v2283 = vmax.f32 %v2233, 0.0
      %v2284 = vmax.f32 %v2236, 0.0
      %v2285 = vmax.f32 %v2241, 0.0
      %v2286 = vmax.f32 %v2244, 0.0
      %v2287 = vmax.f32 %v2249, 0.0
      %v2288 = vmax.f32 %v2252, 0.0
      %v2289 = vmax.f32 %v2257, 0.0
      %v2290 = vmax.f32 %v2260, 0.0
      %v2291 = vmax.f32 %v2265, 0.0
      %v2292 = vmax.f32 %v2268, 0.0
      %v2293 = vmax.f32 %v2273, 0.0
      %v2294 = vmax.f32 %v2276, 0.0
      %v2295 = vld [vmem:[%s19] sm:$0xf]
      %v2296 = vld [vmem:[%s19 + $0x4] sm:$0xf]
      %v2297 = vld [vmem:[%s19 + $0x8] sm:$0xf]
      %v2298 = vld [vmem:[%s19 + $0xc] sm:$0xf]
      %v2299 = vld [vmem:[%s19 + $0x10] sm:$0xf]
      %v2300 = vld [vmem:[%s19 + $0x14] sm:$0xf]
      %v2301 = vld [vmem:[%s19 + $0x18] sm:$0xf]
      %v2302 = vld [vmem:[%s19 + $0x1c] sm:$0xf]
      %v2303 = vld [vmem:[%s20] sm:$0x1]
      %v2304 = vpack.c.bf16 %v2280, %v2279
      %v2305 = vpack.c.bf16 %v2282, %v2281
      %v2306 = vpack.c.bf16 %v2284, %v2283
      %v2307 = vpack.c.bf16 %v2286, %v2285
      %v2308 = vpack.c.bf16 %v2288, %v2287
      %v2309 = vpack.c.bf16 %v2290, %v2289
      %v2310 = vpack.c.bf16 %v2292, %v2291
      %v2311 = vpack.c.bf16 %v2294, %v2293
      %v2313 = vlaneseq
      %v2314 = vshrl.u32 %v2313, 7
      %v2315 = vsub.s32 0, %v2314
      %v2316 = vrot.slane %v2303, %v2315
      %v2326 = vunpack.c.l.b16 %v2295
      %v2327 = vunpack.c.l.b16 %v2296
      %v2328 = vunpack.c.l.b16 %v2297
      %v2329 = vunpack.c.l.b16 %v2298
      %v2330 = vunpack.c.l.b16 %v2299
      %v2331 = vunpack.c.l.b16 %v2300
      %v2332 = vunpack.c.l.b16 %v2301
      %v2333 = vunpack.c.l.b16 %v2302
      %v2334 = vpack.c.b16 %v2327, %v2326
      %v2335 = vpack.c.b16 %v2329, %v2328
      %v2336 = vpack.c.b16 %v2331, %v2330
      %v2337 = vpack.c.b16 %v2333, %v2332
      %v2343 = vsel %vm936, %v2304, 0
      %v2346 = vsel %vm936, %v2305, 0
      %v2349 = vsel %vm936, %v2306, 0
      %v2352 = vsel %vm936, %v2307, 0
      %v2355 = vsel %vm936, %v2308, 0
      %v2358 = vsel %vm936, %v2309, 0
      %v2361 = vsel %vm936, %v2310, 0
      %v2364 = vsel %vm936, %v2311, 0
      %2366 = vmatprep.subr.bf16.mxu0 0
      %2367 = vmatpush1.bf16.msra.mxu0 %v2334
      %2368 = vmatprep.subr.bf16.mxu0 0
      %2369 = vmatpush1.bf16.msra.mxu0 %v2335
      %2370 = vmatprep.subr.bf16.mxu0 0
      %2371 = vmatpush1.bf16.msra.mxu0 %v2336
      %2372 = vmatprep.subr.bf16.mxu0 0
      %2373 = vmatpush1.bf16.msra.mxu0 %v2337
      %2374 = vmatprep.subr.bf16.mxu0 0
      %2375 = vmatpush1.bf16.msra.mxu0 0
      %2376 = vmatprep.subr.bf16.mxu0 0
      %2377 = vmatpush1.bf16.msra.mxu0 0
      %2378 = vmatprep.subr.bf16.mxu0 0
      %2379 = vmatpush1.bf16.msra.mxu0 0
      %2380 = vmatprep.subr.bf16.mxu0 0
      %2381 = vmatpush1.bf16.msra.mxu0 0
      %2382 = vmatprep.subr.bf16.mxu0 0
      %2383 = vmatpush1.bf16.msra.mxu0 0
      %2384 = vmatprep.subr.bf16.mxu0 0
      %2385 = vmatpush1.bf16.msra.mxu0 0
      %2386 = vmatprep.subr.bf16.mxu0 0
      %2387 = vmatpush1.bf16.msra.mxu0 0
      %2388 = vmatprep.subr.bf16.mxu0 0
      %2389 = vmatpush1.bf16.msra.mxu0 0
      %2390 = vmatprep.subr.bf16.mxu0 0
      %2391 = vmatpush1.bf16.msra.mxu0 0
      %2392 = vmatprep.subr.bf16.mxu0 0
      %2393 = vmatpush1.bf16.msra.mxu0 0
      %2394 = vmatprep.subr.bf16.mxu0 0
      %2395 = vmatpush1.bf16.msra.mxu0 0
      %2396 = vmatprep.subr.bf16.mxu0 0
      %2397 = vmatpush1.bf16.msra.mxu0 0
      %2398 = vmatprep.mubr.bf16.mxu0 0
      %2399 = vmatmul.mubr.bf16.gmra.mrb[0].mxu0 %v2343
      %v2400 = vpop.f32.mrb[0].mxu0
      %v2401 = vadd.f32 %v2316, %v2400
      %v2402 = vpop.f32.mrb[0].mxu0
      %v2403 = vpop.f32.mrb[0].mxu0
      %v2404 = vadd.f32 %v2316, %v2403
      %v2405 = vpop.f32.mrb[0].mxu0
      %2406 = vmatprep.mubr.bf16.mxu0 0
      %2407 = vmatmul.mubr.bf16.gmra.mrb[0].mxu0 %v2346
      %v2408 = vpop.f32.mrb[0].mxu0
      %v2409 = vadd.f32 %v2316, %v2408
      %v2410 = vpop.f32.mrb[0].mxu0
      %v2411 = vpop.f32.mrb[0].mxu0
      %v2412 = vadd.f32 %v2316, %v2411
      %v2413 = vpop.f32.mrb[0].mxu0
      %2414 = vmatprep.mubr.bf16.mxu0 0
      %2415 = vmatmul.mubr.bf16.gmra.mrb[0].mxu0 %v2349
      %v2416 = vpop.f32.mrb[0].mxu0
      %v2417 = vadd.f32 %v2316, %v2416
      %v2418 = vpop.f32.mrb[0].mxu0
      %v2419 = vpop.f32.mrb[0].mxu0
      %v2420 = vadd.f32 %v2316, %v2419
      %v2421 = vpop.f32.mrb[0].mxu0
      %2422 = vmatprep.mubr.bf16.mxu0 0
      %2423 = vmatmul.mubr.bf16.gmra.mrb[0].mxu0 %v2352
      %v2424 = vpop.f32.mrb[0].mxu0
      %v2425 = vadd.f32 %v2316, %v2424
      %v2426 = vpop.f32.mrb[0].mxu0
      %v2427 = vpop.f32.mrb[0].mxu0
      %v2428 = vadd.f32 %v2316, %v2427
      %v2429 = vpop.f32.mrb[0].mxu0
      %2430 = vmatprep.mubr.bf16.mxu0 0
      %2431 = vmatmul.mubr.bf16.gmra.mrb[0].mxu0 %v2355
      %v2432 = vpop.f32.mrb[0].mxu0
      %v2433 = vadd.f32 %v2316, %v2432
      %v2434 = vpop.f32.mrb[0].mxu0
      %v2435 = vpop.f32.mrb[0].mxu0
      %v2436 = vadd.f32 %v2316, %v2435
      %v2437 = vpop.f32.mrb[0].mxu0
      %2438 = vmatprep.mubr.bf16.mxu0 0
      %2439 = vmatmul.mubr.bf16.gmra.mrb[0].mxu0 %v2358
      %v2440 = vpop.f32.mrb[0].mxu0
      %v2441 = vadd.f32 %v2316, %v2440
      %v2442 = vpop.f32.mrb[0].mxu0
      %v2443 = vpop.f32.mrb[0].mxu0
      %v2444 = vadd.f32 %v2316, %v2443
      %v2445 = vpop.f32.mrb[0].mxu0
      %2446 = vmatprep.mubr.bf16.mxu0 0
      %2447 = vmatmul.mubr.bf16.gmra.mrb[0].mxu0 %v2361
      %v2448 = vpop.f32.mrb[0].mxu0
      %v2449 = vadd.f32 %v2316, %v2448
      %v2450 = vpop.f32.mrb[0].mxu0
      %v2451 = vpop.f32.mrb[0].mxu0
      %v2452 = vadd.f32 %v2316, %v2451
      %v2453 = vpop.f32.mrb[0].mxu0
      %2454 = vmatprep.mubr.bf16.mxu0 0
      %2455 = vmatmul.mubr.bf16.gmra.mrb[0].mxu0 %v2364
      %v2456 = vpop.f32.mrb[0].mxu0
      %v2457 = vadd.f32 %v2316, %v2456
      %v2458 = vpop.f32.mrb[0].mxu0
      %v2459 = vpop.f32.mrb[0].mxu0
      %v2460 = vadd.f32 %v2316, %v2459
      %v2461 = vpop.f32.mrb[0].mxu0
      %2462 = vdwg.mxu0
      %2463 = vst.msk [vmem:[%s680] sm:$0xff] %vm747, %v2401
      %2464 = vst.msk [vmem:[%s680 + $0x8] sm:$0xff] %vm747, %v2404
      %2465 = vst.msk [vmem:[%s680 + $0x10] sm:$0xff] %vm747, %v2409
      %2466 = vst.msk [vmem:[%s680 + $0x18] sm:$0xff] %vm747, %v2412
      %2467 = vst.msk [vmem:[%s680 + $0x20] sm:$0xff] %vm747, %v2417
      %2468 = vst.msk [vmem:[%s680 + $0x28] sm:$0xff] %vm747, %v2420
      %2469 = vst.msk [vmem:[%s680 + $0x30] sm:$0xff] %vm747, %v2425
      %2470 = vst.msk [vmem:[%s680 + $0x38] sm:$0xff] %vm747, %v2428
      %2471 = vst.msk [vmem:[%s680 + $0x40] sm:$0xff] %vm747, %v2433
      %2472 = vst.msk [vmem:[%s680 + $0x48] sm:$0xff] %vm747, %v2436
      %2473 = vst.msk [vmem:[%s680 + $0x50] sm:$0xff] %vm747, %v2441
      %2474 = vst.msk [vmem:[%s680 + $0x58] sm:$0xff] %vm747, %v2444
      %2475 = vst.msk [vmem:[%s680 + $0x60] sm:$0xff] %vm747, %v2449
      %2476 = vst.msk [vmem:[%s680 + $0x68] sm:$0xff] %vm747, %v2452
      %2477 = vst.msk [vmem:[%s680 + $0x70] sm:$0xff] %vm747, %v2457
      %2478 = vst.msk [vmem:[%s680 + $0x78] sm:$0xff] %vm747, %v2460
      %s2479 = smul.u32 16, %s32
      %p2480 = scmp.lt.s32.totalorder %s2479, 31
      %s2481 = scalar_select %p2480, %s2479, 31
      %s2482 = smul.addr %s2481, 8
      %s2483 = scalar_lea.vmem %s21, %s2482
      // Predicated region
      $region105: #{tpu_custom_call.1} parent=103 // pred_check
        %p2484 = pneg %p501
      $region106: #{tpu_custom_call.1} parent=103 // pred_check_branch
        %2486 = sbr.rel (%p2484) target = $region108
      $region107: #{tpu_custom_call.1} parent=103 // pred_region
        %s2487 = smul.u32 16, %s32
      $region108: #{tpu_custom_call.1} parent=103 // pred_fallthru
        _
    $region104: #{tpu_custom_call.1} parent=5 // pred_fallthru
      _
    %p2488 = scmp.le.s32.totalorder 2, %s27
    // Predicated region
    $region109: #{tpu_custom_call.1} parent=5 // pred_check
      %p2489 = pneg %p2488
    $region110: #{tpu_custom_call.1} parent=5 // pred_check_branch
      %2491 = sbr.rel (%p2489) target = $region112
    $region111: #{tpu_custom_call.1} parent=5 // pred_region
      %s2492 = ssub.s32 %s27, 2
      // Predicated region
      $region113: #{tpu_custom_call.1} parent=111 // pred_check
        %p2493 = pneg %p507
      $region114: #{tpu_custom_call.1} parent=111 // pred_check_branch
        %2495 = sbr.rel (%p2493) target = $region116
      $region115: #{tpu_custom_call.1} parent=111 // pred_region
        %s2496 = smul.u32 16, %s33
        %p2497 = scmp.lt.s32.totalorder %s2496, 31
        %s2498 = scalar_select %p2497, %s2496, 31
        %s2499 = smul.addr %s2498, 8
        %s2500 = scalar_lea.vmem %s21, %s2499
      $region116: #{tpu_custom_call.1} parent=111 // pred_fallthru
        _
    $region112: #{tpu_custom_call.1} parent=5 // pred_fallthru
      _
  $region6: #{tpu_custom_call.1} parent=0 // loop_footer
    %s31 = sadd.s32 1, %s27
  $region7: #{tpu_custom_call.1} parent=0 // loop_footer_branch
    %26 = sbr.rel target = $region3
  $region8: #{tpu_custom_call.1} parent=0 // loop_exit
    _

</llo_original>
